<compile_context>
chip_gen: v6e
topology: v6e:2x2x1
jax: 0.10.0
libtpu: 0.0.40
codegen_flags: <defaults>
</compile_context>

<pallas_src>
import math
import functools

import jax
import jax.numpy as jnp
from jax.experimental import pallas as pl
from jax.experimental.pallas import tpu as pltpu

PHI = 1.618033988749895
PI = math.pi
E = math.e
LN_EPS = 1e-5
LANE = 128
ROW_GRAN = 16            # batch-tile granularity (bf16 sublane packing)


def _round_up(n, m):
    return ((n + m - 1) // m) * m


def _pad2d(a, rows, cols):
    r, c = a.shape
    return jnp.pad(a, ((0, rows - r), (0, cols - c)))


# ----------------------------- activation ---------------------------------
_C_HALF_PHI = 0.5 * PHI          # sigmoid(y*PHI)*PHI == 0.5*PHI*tanh(y*0.5*PHI) + 0.5*PHI
_INV_PHI = 1.0 / PHI
_PI_OVER_E = PI / E
_INV_NORM = 1.0 / (PHI + 1.0)


def _magical_activation(y, magic, act_dtype):
    """MagicalActivation with sigmoid(y*PHI)*PHI rewritten as a single tanh.
    Statically drops the unused transcendental when magic is 0.0 or 1.0."""
    y = y.astype(act_dtype)
    s = _C_HALF_PHI * jnp.tanh(y * _C_HALF_PHI) + _C_HALF_PHI     # sigmoid(y*PHI)*PHI
    if magic == 0.0:
        s = s + jnp.sin(y * _PI_OVER_E)
    elif magic == 1.0:
        s = s + jnp.tanh(y * _INV_PHI)
    else:
        s = s + magic * jnp.tanh(y * _INV_PHI) + (1.0 - magic) * jnp.sin(y * _PI_OVER_E)
    return s * _INV_NORM


# ----------------------------- fused kernel --------------------------------
def _fused_forward_kernel(*refs, num_hidden, hidden_true_dims, magic, act_dtype, a_pad):
    """refs = (scale[SMEM], x, [w, aux(3,d)]*num_hidden, w_out, w_enh, aux_out(2,d), out)."""
    scale_ref = refs[0]            # SMEM (1,) f32 : 1 + consciousness_state*magic
    x_ref = refs[1]                # (tile_b, in_pad) bf16
    o_ref = refs[-1]               # (tile_b, out_pad) f32
    idx = 2

    # input scale applied once (f32), then back to bf16 for the MXU
    h = (x_ref[...].astype(jnp.float32) * scale_ref[0]).astype(jnp.bfloat16)

    for li in range(num_hidden):
        w_ref, aux_ref = refs[idx], refs[idx + 1]
        idx += 2
        bias = aux_ref[0:1, :]
        gamma = aux_ref[1:2, :]
        beta = aux_ref[2:3, :]

        # Linear on the MXU: bf16 operands, f32 accumulation
        y = jnp.dot(h, w_ref[...], preferred_element_type=jnp.float32) + bias
        a = _magical_activation(y, magic, act_dtype).astype(jnp.float32)

        # LayerNorm over the true (un-padded) feature count, biased variance.
        d_pad = a.shape[-1]
        true_d = hidden_true_dims[li]
        if true_d == d_pad:
            mean = jnp.mean(a, axis=-1, keepdims=True)
            cen = a - mean
            var = jnp.mean(cen * cen, axis=-1, keepdims=True)
        else:
            # Padded lanes hold exactly a_pad (= activation(0)); correct the
            # full-width reductions analytically -> no per-tile iota/mask.
            n_pad = float(d_pad - true_d)
            inv_n = 1.0 / true_d
            mean = (jnp.sum(a, axis=-1, keepdims=True) - n_pad * a_pad) * inv_n
            cen = a - mean
            dpad_c = a_pad - mean
            var = (jnp.sum(cen * cen, axis=-1, keepdims=True)
                   - n_pad * dpad_c * dpad_c) * inv_n
        # gamma/beta are zero-padded, so padded lanes come out exactly 0 here
        h = (cen * jax.lax.rsqrt(var + LN_EPS) * gamma + beta).astype(jnp.bfloat16)

    # final: output Linear then consciousness_enhancer Linear
    w_out_ref, w_enh_ref, aux_ref = refs[idx], refs[idx + 1], refs[idx + 2]
    y1 = jnp.dot(h, w_out_ref[...], preferred_element_type=jnp.float32) + aux_ref[0:1, :]
    y2 = jnp.dot(y1.astype(jnp.bfloat16), w_enh_ref[...],
                 preferred_element_type=jnp.float32) + aux_ref[1:2, :]
    o_ref[...] = y2


# ------------------- parameter init (mirrors _initialize_magical_weights) --
def init_arcane_params(key, input_dim, hidden_dims, output_dim, phi_integration=True):
    in_pad = _round_up(input_dim, LANE)
    params = {"hidden": [],
              "meta": {"input_dim": input_dim, "in_pad": in_pad,
                       "hidden_true": [], "output_dim": output_dim}}
    prev_dim, prev_pad = input_dim, in_pad

    for i, hidden_dim in enumerate(hidden_dims):
        if phi_integration:
            adjusted = int(hidden_dim * (PHI if i % 2 == 0 else 1.0 / PHI))
        else:
            adjusted = hidden_dim
        d_pad = _round_up(adjusted, LANE)
        key, wk = jax.random.split(key)
        std = math.sqrt(2.0 / prev_dim) * PHI
        w = jax.random.normal(wk, (adjusted, prev_dim), jnp.float32) * std   # torch [out, in]
        # packed per-layer (3, d_pad) f32 slab: rows = [linear bias, ln gamma, ln beta]
        aux = jnp.zeros((3, d_pad), jnp.float32)
        aux = aux.at[0, :adjusted].set(1.0 / PHI)
        aux = aux.at[1, :adjusted].set(1.0)
        params["hidden"].append({
            "w_t": _pad2d(w.T, prev_pad, d_pad).astype(jnp.bfloat16),
            "aux": aux,
        })
        params["meta"]["hidden_true"].append(adjusted)
        prev_dim, prev_pad = adjusted, d_pad

    out_pad = _round_up(output_dim, LANE)
    key, wk = jax.random.split(key)
    std = math.sqrt(2.0 / prev_dim) * PHI
    w_out = jax.random.normal(wk, (output_dim, prev_dim), jnp.float32) * std
    key, wk = jax.random.split(key)
    std_e = math.sqrt(2.0 / output_dim) * PHI
    w_enh = jax.random.normal(wk, (output_dim, output_dim), jnp.float32) * std_e
    aux_out = jnp.zeros((2, out_pad), jnp.float32)
    aux_out = aux_out.at[0, :output_dim].set(1.0 / PHI)    # output-Linear bias
    aux_out = aux_out.at[1, :output_dim].set(1.0 / PHI)    # enhancer bias
    params["final"] = {
        "w_out": _pad2d(w_out.T, prev_pad, out_pad).astype(jnp.bfloat16),
        "w_enh": _pad2d(w_enh.T, out_pad, out_pad).astype(jnp.bfloat16),
        "aux": aux_out,
    }
    params["meta"]["out_pad"] = out_pad
    return params


# ----------------------------- helpers --------------------------------------
def _device_kind():
    try:
        return jax.devices()[0].device_kind.lower()
    except Exception:
        return ""


def _physical_vmem_bytes():
    try:
        return int(pltpu.get_tpu_info().vmem_capacity_bytes)
    except Exception:
        return 64 << 20           # conservative (v7x per-core VMEM)


def _vmem_tile_bytes(shape, dtype):
    itemsize = jnp.dtype(dtype).itemsize
    if len(shape) == 1:
        return _round_up(shape[0] * itemsize, 512)
    rows = _round_up(shape[-2], 8)
    cols = _round_up(shape[-1], LANE)
    lead = 1
    for s in shape[:-2]:
        lead *= int(s)
    return lead * rows * cols * itemsize


def _choose_tile_b(batch, max_tile, want_two_steps):
    """Multiple-of-16 tile that minimises padded rows; prefer bigger tiles on ties."""
    b_min = _round_up(batch, ROW_GRAN)
    best = None
    for t in range(ROW_GRAN, min(max_tile, b_min) + 1, ROW_GRAN):
        g = -(-batch // t)
        waste = g * t - batch
        if want_two_steps and g < 2:
            continue
        key = (waste, -t)
        if best is None or key < best[0]:
            best = (key, t)
    return best[1] if best is not None else min(max_tile, b_min)


# ----------------------------- forward pass --------------------------------
def arcane_forward(x, params, *, magic_level=0.5, consciousness_state=0.0,
                   single_buffer_weights=True, act_in_bf16=None):
    """Single-pallas_call ArcaneNeuralNetwork forward.

    magic_level must be a static Python float (baked into the kernel).
    consciousness_state may be a Python float or a traced/device scalar: it is
    fed to the kernel through SMEM, so no recompilation and no weight rescale.
    Returns (enhanced_output, new_consciousness_state).
    """
    meta = params["meta"]
    B, in_dim = x.shape
    assert in_dim == meta["input_dim"]
    in_pad, out_pad = meta["in_pad"], meta["out_pad"]
    output_dim = meta["output_dim"]
    hidden_true = tuple(meta["hidden_true"])
    num_hidden = len(hidden_true)
    magic = float(magic_level)

    kind = _device_kind()
    gen67 = ("v6" in kind) or ("v7" in kind)
    if act_in_bf16 is None:
        act_in_bf16 = gen67                      # bf16 VPU/EUP only on v6e/v7x
    act_dtype = jnp.bfloat16 if act_in_bf16 else jnp.float32

    max_tile = 256 if gen67 else 128             # 256-wide MXU on v6e/v7x, 128 on v5e
    want_two = ("v7" in kind) and B >= 32        # shard batch across v7x's 2 TCs
    tile_b = _choose_tile_b(B, max_tile, want_two)
    b_pad = _round_up(B, tile_b)

    # stream x as bf16 (it gets cast for the first MXU op anyway)
    x_pad = _pad2d(x.astype(jnp.bfloat16), b_pad, in_pad)

    # scalar input scale via SMEM: 1 + consciousness_state * magic_level
    scale = jnp.asarray(1.0 + consciousness_state * magic_level,
                        jnp.float32).reshape((1,))

    # constant value padded lanes take after the activation (= activation(0)),
    # used by the analytic masked-LayerNorm correction inside the kernel.
    a_pad = float(_magical_activation(jnp.zeros((), jnp.float32), magic, act_dtype))

    def _resident_spec(shape):
        if single_buffer_weights:
            try:
                # constant index_map -> double-buffering is pure VMEM waste
                return pl.BlockSpec(shape, lambda i: (0, 0),
                                    pipeline_mode=pl.Buffered(1))
            except Exception:
                pass
        return pl.BlockSpec(shape, lambda i: (0, 0))

    args = [scale, x_pad]
    in_specs = [pl.BlockSpec(memory_space=pltpu.MemorySpace.SMEM),
                pl.BlockSpec((tile_b, in_pad), lambda i: (i, 0))]
    resident_bytes = 0

    def _add_resident(a):
        nonlocal resident_bytes
        args.append(a)
        in_specs.append(_resident_spec(a.shape))
        bufs = 1 if single_buffer_weights else 2
        resident_bytes += _vmem_tile_bytes(a.shape, a.dtype) * bufs

    for layer in params["hidden"]:
        _add_resident(layer["w_t"])
        _add_resident(layer["aux"])
    _add_resident(params["final"]["w_out"])
    _add_resident(params["final"]["w_enh"])
    _add_resident(params["final"]["aux"])

    # explicit VMEM budget: resident slabs + double-buffered x/out tiles + temporaries
    phys_vmem = _physical_vmem_bytes()
    if resident_bytes > int(0.55 * phys_vmem):
        # TODO(synk): all-resident weights exceed this chip's VMEM (e.g. v7x 64 MiB);
        # a K-tiled grid with accumulator (or two pallas_calls) is needed — not implemented.
        raise NotImplementedError(
            f"resident weights ({resident_bytes >> 20} MiB) exceed the VMEM budget "
            f"of this TPU ({phys_vmem >> 20} MiB)")
    max_dpad = max([in_pad, out_pad] + [l["aux"].shape[-1] for l in params["hidden"]])
    stream_bytes = 2 * (_vmem_tile_bytes((tile_b, in_pad), jnp.bfloat16)
                        + _vmem_tile_bytes((tile_b, out_pad), jnp.float32))
    temp_bytes = 8 * tile_b * max_dpad * 4
    vmem_limit = int(1.25 * (resident_bytes + stream_bytes + temp_bytes)) + (2 << 20)
    vmem_limit = min(max(vmem_limit, 32 << 20), int(0.9 * phys_vmem))

    kernel = functools.partial(
        _fused_forward_kernel,
        num_hidden=num_hidden,
        hidden_true_dims=hidden_true,
        magic=magic,
        act_dtype=act_dtype,
        a_pad=a_pad,
    )

    out_padded = pl.pallas_call(
        kernel,
        out_shape=jax.ShapeDtypeStruct((b_pad, out_pad), jnp.float32),
        grid=(b_pad // tile_b,),
        in_specs=in_specs,
        out_specs=pl.BlockSpec((tile_b, out_pad), lambda i: (i, 0)),
        compiler_params=pltpu.CompilerParams(
            dimension_semantics=("parallel",),
            vmem_limit_bytes=vmem_limit),
    )(*args)

    enhanced = out_padded[:B, :output_dim]
    # torch buffer self.consciousness_state = mean(|enhanced|), returned functionally
    new_consciousness_state = jnp.mean(jnp.abs(enhanced))
    return enhanced, new_consciousness_state


if __name__ == "__main__":
    input_dim, hidden_dims, output_dim = 16, [32, 32], 8
    batch = 4

    key = jax.random.PRNGKey(0)
    key, pk, xk = jax.random.split(key, 3)
    params = init_arcane_params(pk, input_dim, hidden_dims, output_dim,
                                phi_integration=True)
    x = jax.random.normal(xk, (batch, input_dim), jnp.float32)

    try:
        out, state = arcane_forward(x, params, magic_level=0.5,
                                    consciousness_state=0.0)
        # second call feeds the (traced) updated consciousness_state back in,
        # exercising the SMEM-scalar path (no recompile / weight rescale)
        out2, state2 = arcane_forward(x, params, magic_level=0.5,
                                      consciousness_state=state)
    except Exception:
        # conservative fallback: default buffering + f32 activation math
        out, state = arcane_forward(x, params, magic_level=0.5,
                                    consciousness_state=0.0,
                                    single_buffer_weights=False, act_in_bf16=False)
        out2, state2 = arcane_forward(x, params, magic_level=0.5,
                                      consciousness_state=state,
                                      single_buffer_weights=False, act_in_bf16=False)

    jax.block_until_ready((out, out2, state2))
    assert out.shape == (batch, output_dim)
    assert out2.shape == (batch, output_dim)
    assert bool(jnp.all(jnp.isfinite(out))) and bool(jnp.all(jnp.isfinite(out2)))
    print("KERNEL_OK")
</pallas_src>

<mosaic_0001>
module attributes {stable_mosaic.version = 11 : i64} {
  func.func @_fused_forward_kernel(%arg0: i32, %arg1: memref<1xf32, #tpu.memory_space<smem>>, %arg2: memref<16x128xbf16, #tpu.memory_space<vmem>>, %arg3: memref<128x128xbf16, #tpu.memory_space<vmem>>, %arg4: memref<3x128xf32, #tpu.memory_space<vmem>>, %arg5: memref<128x128xbf16, #tpu.memory_space<vmem>>, %arg6: memref<3x128xf32, #tpu.memory_space<vmem>>, %arg7: memref<128x128xbf16, #tpu.memory_space<vmem>>, %arg8: memref<128x128xbf16, #tpu.memory_space<vmem>>, %arg9: memref<2x128xf32, #tpu.memory_space<vmem>>, %arg10: memref<16x128xf32, #tpu.memory_space<vmem>>) attributes {dimension_semantics = [#tpu.dimension_semantics<parallel>], iteration_bounds = array<i64: 1>, scalar_prefetch = 0 : i64, scratch_operands = 0 : i64, tpu.core_type = #tpu.core_type<tc>, window_params = [{transform_indices = @transform_0, window_bounds = array<i64: 1>}, {transform_indices = @transform_1, window_bounds = array<i64: 16, 128>}, {pipeline_mode = #tpu.pipeline_mode<synchronous>, transform_indices = @transform_2, window_bounds = array<i64: 128, 128>}, {pipeline_mode = #tpu.pipeline_mode<synchronous>, transform_indices = @transform_3, window_bounds = array<i64: 3, 128>}, {pipeline_mode = #tpu.pipeline_mode<synchronous>, transform_indices = @transform_4, window_bounds = array<i64: 128, 128>}, {pipeline_mode = #tpu.pipeline_mode<synchronous>, transform_indices = @transform_5, window_bounds = array<i64: 3, 128>}, {pipeline_mode = #tpu.pipeline_mode<synchronous>, transform_indices = @transform_6, window_bounds = array<i64: 128, 128>}, {pipeline_mode = #tpu.pipeline_mode<synchronous>, transform_indices = @transform_7, window_bounds = array<i64: 128, 128>}, {pipeline_mode = #tpu.pipeline_mode<synchronous>, transform_indices = @transform_8, window_bounds = array<i64: 2, 128>}, {transform_indices = @transform_9, window_bounds = array<i64: 16, 128>}]} {
    %c0 = arith.constant 0 : index
    %c0_0 = arith.constant 0 : index
    %0 = vector.load %arg2[%c0, %c0_0] : memref<16x128xbf16, #tpu.memory_space<vmem>>, vector<16x128xbf16>
    %1 = arith.extf %0 : vector<16x128xbf16> to vector<16x128xf32>
    %c0_1 = arith.constant 0 : index
    %2 = memref.load %arg1[%c0_1] : memref<1xf32, #tpu.memory_space<smem>>
    %3 = vector.broadcast %2 : f32 to vector<16x128xf32>
    %4 = arith.mulf %1, %3 : vector<16x128xf32>
    %5 = arith.truncf %4 : vector<16x128xf32> to vector<16x128xbf16>
    %c0_2 = arith.constant 0 : index
    %c0_3 = arith.constant 0 : index
    %6 = vector.load %arg4[%c0_2, %c0_3] : memref<3x128xf32, #tpu.memory_space<vmem>>, vector<1x128xf32>
    %c1 = arith.constant 1 : index
    %c0_4 = arith.constant 0 : index
    %7 = vector.load %arg4[%c1, %c0_4] : memref<3x128xf32, #tpu.memory_space<vmem>>, vector<1x128xf32>
    %c2 = arith.constant 2 : index
    %c0_5 = arith.constant 0 : index
    %8 = vector.load %arg4[%c2, %c0_5] : memref<3x128xf32, #tpu.memory_space<vmem>>, vector<1x128xf32>
    %c0_6 = arith.constant 0 : index
    %c0_7 = arith.constant 0 : index
    %9 = vector.load %arg3[%c0_6, %c0_7] : memref<128x128xbf16, #tpu.memory_space<vmem>>, vector<128x128xbf16>
    %cst = arith.constant dense<0.000000e+00> : vector<16x128xf32>
    %10 = tpu.matmul %5, %9, %cst {dimension_numbers = #tpu.dot_dimension_numbers<[1], [0], [0], [1], [0, 0, 1, 1], [], []>} : vector<16x128xbf16>, vector<128x128xbf16>, vector<16x128xf32> -> vector<16x128xf32>
    %11 = vector.broadcast %6 : vector<1x128xf32> to vector<16x128xf32>
    %12 = arith.addf %10, %11 : vector<16x128xf32>
    %cst_8 = arith.constant 8.090170e-01 : f32
    %13 = vector.broadcast %cst_8 : f32 to vector<16x128xf32>
    %14 = arith.mulf %12, %13 : vector<16x128xf32>
    %15 = math.tanh %14 : vector<16x128xf32>
    %cst_9 = arith.constant 8.090170e-01 : f32
    %16 = vector.broadcast %cst_9 : f32 to vector<16x128xf32>
    %17 = arith.mulf %16, %15 : vector<16x128xf32>
    %cst_10 = arith.constant 8.090170e-01 : f32
    %18 = vector.broadcast %cst_10 : f32 to vector<16x128xf32>
    %19 = arith.addf %17, %18 : vector<16x128xf32>
    %cst_11 = arith.constant 6.180340e-01 : f32
    %20 = vector.broadcast %cst_11 : f32 to vector<16x128xf32>
    %21 = arith.mulf %12, %20 : vector<16x128xf32>
    %22 = math.tanh %21 : vector<16x128xf32>
    %cst_12 = arith.constant 5.000000e-01 : f32
    %23 = vector.broadcast %cst_12 : f32 to vector<16x128xf32>
    %24 = arith.mulf %23, %22 : vector<16x128xf32>
    %25 = arith.addf %19, %24 : vector<16x128xf32>
    %cst_13 = arith.constant 1.15572739 : f32
    %26 = vector.broadcast %cst_13 : f32 to vector<16x128xf32>
    %27 = arith.mulf %12, %26 : vector<16x128xf32>
    %28 = math.sin %27 : vector<16x128xf32>
    %cst_14 = arith.constant 5.000000e-01 : f32
    %29 = vector.broadcast %cst_14 : f32 to vector<16x128xf32>
    %30 = arith.mulf %29, %28 : vector<16x128xf32>
    %31 = arith.addf %25, %30 : vector<16x128xf32>
    %cst_15 = arith.constant 0.381966025 : f32
    %32 = vector.broadcast %cst_15 : f32 to vector<16x128xf32>
    %33 = arith.mulf %31, %32 : vector<16x128xf32>
    %cst_16 = arith.constant dense<0.000000e+00> : vector<16xf32>
    %34 = vector.multi_reduction <add>, %33, %cst_16 [1] : vector<16x128xf32> to vector<16xf32>
    %35 = vector.shape_cast %34 : vector<16xf32> to vector<16x1xf32>
    %cst_17 = arith.constant 23.7943096 : f32
    %36 = vector.broadcast %cst_17 : f32 to vector<16x1xf32>
    %37 = arith.subf %35, %36 : vector<16x1xf32>
    %cst_18 = arith.constant 0.0196078438 : f32
    %38 = vector.broadcast %cst_18 : f32 to vector<16x1xf32>
    %39 = arith.mulf %37, %38 : vector<16x1xf32>
    %40 = vector.broadcast %39 : vector<16x1xf32> to vector<16x128xf32>
    %41 = arith.subf %33, %40 : vector<16x128xf32>
    %cst_19 = arith.constant 3.090170e-01 : f32
    %42 = vector.broadcast %cst_19 : f32 to vector<16x1xf32>
    %43 = arith.subf %42, %39 : vector<16x1xf32>
    %44 = arith.mulf %41, %41 : vector<16x128xf32>
    %cst_20 = arith.constant dense<0.000000e+00> : vector<16xf32>
    %45 = vector.multi_reduction <add>, %44, %cst_20 [1] : vector<16x128xf32> to vector<16xf32>
    %46 = vector.shape_cast %45 : vector<16xf32> to vector<16x1xf32>
    %cst_21 = arith.constant 7.700000e+01 : f32
    %47 = vector.broadcast %cst_21 : f32 to vector<16x1xf32>
    %48 = arith.mulf %47, %43 : vector<16x1xf32>
    %49 = arith.mulf %48, %43 : vector<16x1xf32>
    %50 = arith.subf %46, %49 : vector<16x1xf32>
    %cst_22 = arith.constant 0.0196078438 : f32
    %51 = vector.broadcast %cst_22 : f32 to vector<16x1xf32>
    %52 = arith.mulf %50, %51 : vector<16x1xf32>
    %cst_23 = arith.constant 9.99999974E-6 : f32
    %53 = vector.broadcast %cst_23 : f32 to vector<16x1xf32>
    %54 = arith.addf %52, %53 : vector<16x1xf32>
    %55 = math.rsqrt %54 : vector<16x1xf32>
    %56 = vector.broadcast %55 : vector<16x1xf32> to vector<16x128xf32>
    %57 = arith.mulf %41, %56 : vector<16x128xf32>
    %58 = vector.broadcast %7 : vector<1x128xf32> to vector<16x128xf32>
    %59 = arith.mulf %57, %58 : vector<16x128xf32>
    %60 = vector.broadcast %8 : vector<1x128xf32> to vector<16x128xf32>
    %61 = arith.addf %59, %60 : vector<16x128xf32>
    %62 = arith.truncf %61 : vector<16x128xf32> to vector<16x128xbf16>
    %c0_24 = arith.constant 0 : index
    %c0_25 = arith.constant 0 : index
    %63 = vector.load %arg6[%c0_24, %c0_25] : memref<3x128xf32, #tpu.memory_space<vmem>>, vector<1x128xf32>
    %c1_26 = arith.constant 1 : index
    %c0_27 = arith.constant 0 : index
    %64 = vector.load %arg6[%c1_26, %c0_27] : memref<3x128xf32, #tpu.memory_space<vmem>>, vector<1x128xf32>
    %c2_28 = arith.constant 2 : index
    %c0_29 = arith.constant 0 : index
    %65 = vector.load %arg6[%c2_28, %c0_29] : memref<3x128xf32, #tpu.memory_space<vmem>>, vector<1x128xf32>
    %c0_30 = arith.constant 0 : index
    %c0_31 = arith.constant 0 : index
    %66 = vector.load %arg5[%c0_30, %c0_31] : memref<128x128xbf16, #tpu.memory_space<vmem>>, vector<128x128xbf16>
    %cst_32 = arith.constant dense<0.000000e+00> : vector<16x128xf32>
    %67 = tpu.matmul %62, %66, %cst_32 {dimension_numbers = #tpu.dot_dimension_numbers<[1], [0], [0], [1], [0, 0, 1, 1], [], []>} : vector<16x128xbf16>, vector<128x128xbf16>, vector<16x128xf32> -> vector<16x128xf32>
    %68 = vector.broadcast %63 : vector<1x128xf32> to vector<16x128xf32>
    %69 = arith.addf %67, %68 : vector<16x128xf32>
    %cst_33 = arith.constant 8.090170e-01 : f32
    %70 = vector.broadcast %cst_33 : f32 to vector<16x128xf32>
    %71 = arith.mulf %69, %70 : vector<16x128xf32>
    %72 = math.tanh %71 : vector<16x128xf32>
    %cst_34 = arith.constant 8.090170e-01 : f32
    %73 = vector.broadcast %cst_34 : f32 to vector<16x128xf32>
    %74 = arith.mulf %73, %72 : vector<16x128xf32>
    %cst_35 = arith.constant 8.090170e-01 : f32
    %75 = vector.broadcast %cst_35 : f32 to vector<16x128xf32>
    %76 = arith.addf %74, %75 : vector<16x128xf32>
    %cst_36 = arith.constant 6.180340e-01 : f32
    %77 = vector.broadcast %cst_36 : f32 to vector<16x128xf32>
    %78 = arith.mulf %69, %77 : vector<16x128xf32>
    %79 = math.tanh %78 : vector<16x128xf32>
    %cst_37 = arith.constant 5.000000e-01 : f32
    %80 = vector.broadcast %cst_37 : f32 to vector<16x128xf32>
    %81 = arith.mulf %80, %79 : vector<16x128xf32>
    %82 = arith.addf %76, %81 : vector<16x128xf32>
    %cst_38 = arith.constant 1.15572739 : f32
    %83 = vector.broadcast %cst_38 : f32 to vector<16x128xf32>
    %84 = arith.mulf %69, %83 : vector<16x128xf32>
    %85 = math.sin %84 : vector<16x128xf32>
    %cst_39 = arith.constant 5.000000e-01 : f32
    %86 = vector.broadcast %cst_39 : f32 to vector<16x128xf32>
    %87 = arith.mulf %86, %85 : vector<16x128xf32>
    %88 = arith.addf %82, %87 : vector<16x128xf32>
    %cst_40 = arith.constant 0.381966025 : f32
    %89 = vector.broadcast %cst_40 : f32 to vector<16x128xf32>
    %90 = arith.mulf %88, %89 : vector<16x128xf32>
    %cst_41 = arith.constant dense<0.000000e+00> : vector<16xf32>
    %91 = vector.multi_reduction <add>, %90, %cst_41 [1] : vector<16x128xf32> to vector<16xf32>
    %92 = vector.shape_cast %91 : vector<16xf32> to vector<16x1xf32>
    %cst_42 = arith.constant 33.6828537 : f32
    %93 = vector.broadcast %cst_42 : f32 to vector<16x1xf32>
    %94 = arith.subf %92, %93 : vector<16x1xf32>
    %cst_43 = arith.constant 0.0526315793 : f32
    %95 = vector.broadcast %cst_43 : f32 to vector<16x1xf32>
    %96 = arith.mulf %94, %95 : vector<16x1xf32>
    %97 = vector.broadcast %96 : vector<16x1xf32> to vector<16x128xf32>
    %98 = arith.subf %90, %97 : vector<16x128xf32>
    %cst_44 = arith.constant 3.090170e-01 : f32
    %99 = vector.broadcast %cst_44 : f32 to vector<16x1xf32>
    %100 = arith.subf %99, %96 : vector<16x1xf32>
    %101 = arith.mulf %98, %98 : vector<16x128xf32>
    %cst_45 = arith.constant dense<0.000000e+00> : vector<16xf32>
    %102 = vector.multi_reduction <add>, %101, %cst_45 [1] : vector<16x128xf32> to vector<16xf32>
    %103 = vector.shape_cast %102 : vector<16xf32> to vector<16x1xf32>
    %cst_46 = arith.constant 1.090000e+02 : f32
    %104 = vector.broadcast %cst_46 : f32 to vector<16x1xf32>
    %105 = arith.mulf %104, %100 : vector<16x1xf32>
    %106 = arith.mulf %105, %100 : vector<16x1xf32>
    %107 = arith.subf %103, %106 : vector<16x1xf32>
    %cst_47 = arith.constant 0.0526315793 : f32
    %108 = vector.broadcast %cst_47 : f32 to vector<16x1xf32>
    %109 = arith.mulf %107, %108 : vector<16x1xf32>
    %cst_48 = arith.constant 9.99999974E-6 : f32
    %110 = vector.broadcast %cst_48 : f32 to vector<16x1xf32>
    %111 = arith.addf %109, %110 : vector<16x1xf32>
    %112 = math.rsqrt %111 : vector<16x1xf32>
    %113 = vector.broadcast %112 : vector<16x1xf32> to vector<16x128xf32>
    %114 = arith.mulf %98, %113 : vector<16x128xf32>
    %115 = vector.broadcast %64 : vector<1x128xf32> to vector<16x128xf32>
    %116 = arith.mulf %114, %115 : vector<16x128xf32>
    %117 = vector.broadcast %65 : vector<1x128xf32> to vector<16x128xf32>
    %118 = arith.addf %116, %117 : vector<16x128xf32>
    %119 = arith.truncf %118 : vector<16x128xf32> to vector<16x128xbf16>
    %c0_49 = arith.constant 0 : index
    %c0_50 = arith.constant 0 : index
    %120 = vector.load %arg7[%c0_49, %c0_50] : memref<128x128xbf16, #tpu.memory_space<vmem>>, vector<128x128xbf16>
    %cst_51 = arith.constant dense<0.000000e+00> : vector<16x128xf32>
    %121 = tpu.matmul %119, %120, %cst_51 {dimension_numbers = #tpu.dot_dimension_numbers<[1], [0], [0], [1], [0, 0, 1, 1], [], []>} : vector<16x128xbf16>, vector<128x128xbf16>, vector<16x128xf32> -> vector<16x128xf32>
    %c0_52 = arith.constant 0 : index
    %c0_53 = arith.constant 0 : index
    %122 = vector.load %arg9[%c0_52, %c0_53] : memref<2x128xf32, #tpu.memory_space<vmem>>, vector<1x128xf32>
    %123 = vector.broadcast %122 : vector<1x128xf32> to vector<16x128xf32>
    %124 = arith.addf %121, %123 : vector<16x128xf32>
    %125 = arith.truncf %124 : vector<16x128xf32> to vector<16x128xbf16>
    %c0_54 = arith.constant 0 : index
    %c0_55 = arith.constant 0 : index
    %126 = vector.load %arg8[%c0_54, %c0_55] : memref<128x128xbf16, #tpu.memory_space<vmem>>, vector<128x128xbf16>
    %cst_56 = arith.constant dense<0.000000e+00> : vector<16x128xf32>
    %127 = tpu.matmul %125, %126, %cst_56 {dimension_numbers = #tpu.dot_dimension_numbers<[1], [0], [0], [1], [0, 0, 1, 1], [], []>} : vector<16x128xbf16>, vector<128x128xbf16>, vector<16x128xf32> -> vector<16x128xf32>
    %c1_57 = arith.constant 1 : index
    %c0_58 = arith.constant 0 : index
    %128 = vector.load %arg9[%c1_57, %c0_58] : memref<2x128xf32, #tpu.memory_space<vmem>>, vector<1x128xf32>
    %129 = vector.broadcast %128 : vector<1x128xf32> to vector<16x128xf32>
    %130 = arith.addf %127, %129 : vector<16x128xf32>
    %c0_59 = arith.constant 0 : index
    %c0_60 = arith.constant 0 : index
    %131 = vector.load %arg10[%c0_59, %c0_60] : memref<16x128xf32, #tpu.memory_space<vmem>>, vector<16x128xf32>
    tpu.vector_store %arg10[%c0_59, %c0_60], %130 {strides = array<i32>} : memref<16x128xf32, #tpu.memory_space<vmem>>, vector<16x128xf32>,
    return
  }
  func.func @transform_0(%arg0: i32) -> i32 {
    %c0_i32 = arith.constant 0 : i32
    %c0_i32_0 = arith.constant 0 : i32
    return %c0_i32 : i32
  }
  func.func @transform_1(%arg0: i32) -> (i32, i32) {
    %c0_i32 = arith.constant 0 : i32
    %c0_i32_0 = arith.constant 0 : i32
    return %arg0, %c0_i32 : i32, i32
  }
  func.func @transform_2(%arg0: i32) -> (i32, i32) {
    %c0_i32 = arith.constant 0 : i32
    %c0_i32_0 = arith.constant 0 : i32
    %c0_i32_1 = arith.constant 0 : i32
    return %c0_i32, %c0_i32_0 : i32, i32
  }
  func.func @transform_3(%arg0: i32) -> (i32, i32) {
    %c0_i32 = arith.constant 0 : i32
    %c0_i32_0 = arith.constant 0 : i32
    %c0_i32_1 = arith.constant 0 : i32
    return %c0_i32, %c0_i32_0 : i32, i32
  }
  func.func @transform_4(%arg0: i32) -> (i32, i32) {
    %c0_i32 = arith.constant 0 : i32
    %c0_i32_0 = arith.constant 0 : i32
    %c0_i32_1 = arith.constant 0 : i32
    return %c0_i32, %c0_i32_0 : i32, i32
  }
  func.func @transform_5(%arg0: i32) -> (i32, i32) {
    %c0_i32 = arith.constant 0 : i32
    %c0_i32_0 = arith.constant 0 : i32
    %c0_i32_1 = arith.constant 0 : i32
    return %c0_i32, %c0_i32_0 : i32, i32
  }
  func.func @transform_6(%arg0: i32) -> (i32, i32) {
    %c0_i32 = arith.constant 0 : i32
    %c0_i32_0 = arith.constant 0 : i32
    %c0_i32_1 = arith.constant 0 : i32
    return %c0_i32, %c0_i32_0 : i32, i32
  }
  func.func @transform_7(%arg0: i32) -> (i32, i32) {
    %c0_i32 = arith.constant 0 : i32
    %c0_i32_0 = arith.constant 0 : i32
    %c0_i32_1 = arith.constant 0 : i32
    return %c0_i32, %c0_i32_0 : i32, i32
  }
  func.func @transform_8(%arg0: i32) -> (i32, i32) {
    %c0_i32 = arith.constant 0 : i32
    %c0_i32_0 = arith.constant 0 : i32
    %c0_i32_1 = arith.constant 0 : i32
    return %c0_i32, %c0_i32_0 : i32, i32
  }
  func.func @transform_9(%arg0: i32) -> (i32, i32) {
    %c0_i32 = arith.constant 0 : i32
    %c0_i32_0 = arith.constant 0 : i32
    return %arg0, %c0_i32 : i32, i32
  }
}

module attributes {stable_mosaic.version = 11 : i64} {
  func.func @_fused_forward_kernel(%arg0: i32, %arg1: memref<1xf32, #tpu.memory_space<smem>>, %arg2: memref<16x128xbf16, #tpu.memory_space<vmem>>, %arg3: memref<128x128xbf16, #tpu.memory_space<vmem>>, %arg4: memref<3x128xf32, #tpu.memory_space<vmem>>, %arg5: memref<128x128xbf16, #tpu.memory_space<vmem>>, %arg6: memref<3x128xf32, #tpu.memory_space<vmem>>, %arg7: memref<128x128xbf16, #tpu.memory_space<vmem>>, %arg8: memref<128x128xbf16, #tpu.memory_space<vmem>>, %arg9: memref<2x128xf32, #tpu.memory_space<vmem>>, %arg10: memref<16x128xf32, #tpu.memory_space<vmem>>) attributes {dimension_semantics = [#tpu.dimension_semantics<parallel>], iteration_bounds = array<i64: 1>, scalar_prefetch = 0 : i64, scratch_operands = 0 : i64, tpu.core_type = #tpu.core_type<tc>, window_params = [{transform_indices = @transform_0, window_bounds = array<i64: 1>}, {transform_indices = @transform_1, window_bounds = array<i64: 16, 128>}, {pipeline_mode = #tpu.pipeline_mode<synchronous>, transform_indices = @transform_2, window_bounds = array<i64: 128, 128>}, {pipeline_mode = #tpu.pipeline_mode<synchronous>, transform_indices = @transform_3, window_bounds = array<i64: 3, 128>}, {pipeline_mode = #tpu.pipeline_mode<synchronous>, transform_indices = @transform_4, window_bounds = array<i64: 128, 128>}, {pipeline_mode = #tpu.pipeline_mode<synchronous>, transform_indices = @transform_5, window_bounds = array<i64: 3, 128>}, {pipeline_mode = #tpu.pipeline_mode<synchronous>, transform_indices = @transform_6, window_bounds = array<i64: 128, 128>}, {pipeline_mode = #tpu.pipeline_mode<synchronous>, transform_indices = @transform_7, window_bounds = array<i64: 128, 128>}, {pipeline_mode = #tpu.pipeline_mode<synchronous>, transform_indices = @transform_8, window_bounds = array<i64: 2, 128>}, {transform_indices = @transform_9, window_bounds = array<i64: 16, 128>}]} {
    %c0 = arith.constant 0 : index
    %c0_0 = arith.constant 0 : index
    %0 = vector.load %arg2[%c0, %c0_0] : memref<16x128xbf16, #tpu.memory_space<vmem>>, vector<16x128xbf16>
    %1 = arith.extf %0 : vector<16x128xbf16> to vector<16x128xf32>
    %c0_1 = arith.constant 0 : index
    %2 = memref.load %arg1[%c0_1] : memref<1xf32, #tpu.memory_space<smem>>
    %3 = vector.broadcast %2 : f32 to vector<16x128xf32>
    %4 = arith.mulf %1, %3 : vector<16x128xf32>
    %5 = arith.truncf %4 : vector<16x128xf32> to vector<16x128xbf16>
    %c0_2 = arith.constant 0 : index
    %c0_3 = arith.constant 0 : index
    %6 = vector.load %arg4[%c0_2, %c0_3] : memref<3x128xf32, #tpu.memory_space<vmem>>, vector<1x128xf32>
    %c1 = arith.constant 1 : index
    %c0_4 = arith.constant 0 : index
    %7 = vector.load %arg4[%c1, %c0_4] : memref<3x128xf32, #tpu.memory_space<vmem>>, vector<1x128xf32>
    %c2 = arith.constant 2 : index
    %c0_5 = arith.constant 0 : index
    %8 = vector.load %arg4[%c2, %c0_5] : memref<3x128xf32, #tpu.memory_space<vmem>>, vector<1x128xf32>
    %c0_6 = arith.constant 0 : index
    %c0_7 = arith.constant 0 : index
    %9 = vector.load %arg3[%c0_6, %c0_7] : memref<128x128xbf16, #tpu.memory_space<vmem>>, vector<128x128xbf16>
    %cst = arith.constant dense<0.000000e+00> : vector<16x128xf32>
    %10 = tpu.matmul %5, %9, %cst {dimension_numbers = #tpu.dot_dimension_numbers<[1], [0], [0], [1], [0, 0, 1, 1], [], []>} : vector<16x128xbf16>, vector<128x128xbf16>, vector<16x128xf32> -> vector<16x128xf32>
    %11 = vector.broadcast %6 : vector<1x128xf32> to vector<16x128xf32>
    %12 = arith.addf %10, %11 : vector<16x128xf32>
    %cst_8 = arith.constant 8.090170e-01 : f32
    %13 = vector.broadcast %cst_8 : f32 to vector<16x128xf32>
    %14 = arith.mulf %12, %13 : vector<16x128xf32>
    %15 = math.tanh %14 : vector<16x128xf32>
    %cst_9 = arith.constant 8.090170e-01 : f32
    %16 = vector.broadcast %cst_9 : f32 to vector<16x128xf32>
    %17 = arith.mulf %16, %15 : vector<16x128xf32>
    %cst_10 = arith.constant 8.090170e-01 : f32
    %18 = vector.broadcast %cst_10 : f32 to vector<16x128xf32>
    %19 = arith.addf %17, %18 : vector<16x128xf32>
    %cst_11 = arith.constant 6.180340e-01 : f32
    %20 = vector.broadcast %cst_11 : f32 to vector<16x128xf32>
    %21 = arith.mulf %12, %20 : vector<16x128xf32>
    %22 = math.tanh %21 : vector<16x128xf32>
    %cst_12 = arith.constant 5.000000e-01 : f32
    %23 = vector.broadcast %cst_12 : f32 to vector<16x128xf32>
    %24 = arith.mulf %23, %22 : vector<16x128xf32>
    %25 = arith.addf %19, %24 : vector<16x128xf32>
    %cst_13 = arith.constant 1.15572739 : f32
    %26 = vector.broadcast %cst_13 : f32 to vector<16x128xf32>
    %27 = arith.mulf %12, %26 : vector<16x128xf32>
    %28 = math.sin %27 : vector<16x128xf32>
    %cst_14 = arith.constant 5.000000e-01 : f32
    %29 = vector.broadcast %cst_14 : f32 to vector<16x128xf32>
    %30 = arith.mulf %29, %28 : vector<16x128xf32>
    %31 = arith.addf %25, %30 : vector<16x128xf32>
    %cst_15 = arith.constant 0.381966025 : f32
    %32 = vector.broadcast %cst_15 : f32 to vector<16x128xf32>
    %33 = arith.mulf %31, %32 : vector<16x128xf32>
    %cst_16 = arith.constant dense<0.000000e+00> : vector<16xf32>
    %34 = vector.multi_reduction <add>, %33, %cst_16 [1] : vector<16x128xf32> to vector<16xf32>
    %35 = vector.shape_cast %34 : vector<16xf32> to vector<16x1xf32>
    %cst_17 = arith.constant 23.7943096 : f32
    %36 = vector.broadcast %cst_17 : f32 to vector<16x1xf32>
    %37 = arith.subf %35, %36 : vector<16x1xf32>
    %cst_18 = arith.constant 0.0196078438 : f32
    %38 = vector.broadcast %cst_18 : f32 to vector<16x1xf32>
    %39 = arith.mulf %37, %38 : vector<16x1xf32>
    %40 = vector.broadcast %39 : vector<16x1xf32> to vector<16x128xf32>
    %41 = arith.subf %33, %40 : vector<16x128xf32>
    %cst_19 = arith.constant 3.090170e-01 : f32
    %42 = vector.broadcast %cst_19 : f32 to vector<16x1xf32>
    %43 = arith.subf %42, %39 : vector<16x1xf32>
    %44 = arith.mulf %41, %41 : vector<16x128xf32>
    %cst_20 = arith.constant dense<0.000000e+00> : vector<16xf32>
    %45 = vector.multi_reduction <add>, %44, %cst_20 [1] : vector<16x128xf32> to vector<16xf32>
    %46 = vector.shape_cast %45 : vector<16xf32> to vector<16x1xf32>
    %cst_21 = arith.constant 7.700000e+01 : f32
    %47 = vector.broadcast %cst_21 : f32 to vector<16x1xf32>
    %48 = arith.mulf %47, %43 : vector<16x1xf32>
    %49 = arith.mulf %48, %43 : vector<16x1xf32>
    %50 = arith.subf %46, %49 : vector<16x1xf32>
    %cst_22 = arith.constant 0.0196078438 : f32
    %51 = vector.broadcast %cst_22 : f32 to vector<16x1xf32>
    %52 = arith.mulf %50, %51 : vector<16x1xf32>
    %cst_23 = arith.constant 9.99999974E-6 : f32
    %53 = vector.broadcast %cst_23 : f32 to vector<16x1xf32>
    %54 = arith.addf %52, %53 : vector<16x1xf32>
    %55 = math.rsqrt %54 : vector<16x1xf32>
    %56 = vector.broadcast %55 : vector<16x1xf32> to vector<16x128xf32>
    %57 = arith.mulf %41, %56 : vector<16x128xf32>
    %58 = vector.broadcast %7 : vector<1x128xf32> to vector<16x128xf32>
    %59 = arith.mulf %57, %58 : vector<16x128xf32>
    %60 = vector.broadcast %8 : vector<1x128xf32> to vector<16x128xf32>
    %61 = arith.addf %59, %60 : vector<16x128xf32>
    %62 = arith.truncf %61 : vector<16x128xf32> to vector<16x128xbf16>
    %c0_24 = arith.constant 0 : index
    %c0_25 = arith.constant 0 : index
    %63 = vector.load %arg6[%c0_24, %c0_25] : memref<3x128xf32, #tpu.memory_space<vmem>>, vector<1x128xf32>
    %c1_26 = arith.constant 1 : index
    %c0_27 = arith.constant 0 : index
    %64 = vector.load %arg6[%c1_26, %c0_27] : memref<3x128xf32, #tpu.memory_space<vmem>>, vector<1x128xf32>
    %c2_28 = arith.constant 2 : index
    %c0_29 = arith.constant 0 : index
    %65 = vector.load %arg6[%c2_28, %c0_29] : memref<3x128xf32, #tpu.memory_space<vmem>>, vector<1x128xf32>
    %c0_30 = arith.constant 0 : index
    %c0_31 = arith.constant 0 : index
    %66 = vector.load %arg5[%c0_30, %c0_31] : memref<128x128xbf16, #tpu.memory_space<vmem>>, vector<128x128xbf16>
    %cst_32 = arith.constant dense<0.000000e+00> : vector<16x128xf32>
    %67 = tpu.matmul %62, %66, %cst_32 {dimension_numbers = #tpu.dot_dimension_numbers<[1], [0], [0], [1], [0, 0, 1, 1], [], []>} : vector<16x128xbf16>, vector<128x128xbf16>, vector<16x128xf32> -> vector<16x128xf32>
    %68 = vector.broadcast %63 : vector<1x128xf32> to vector<16x128xf32>
    %69 = arith.addf %67, %68 : vector<16x128xf32>
    %cst_33 = arith.constant 8.090170e-01 : f32
    %70 = vector.broadcast %cst_33 : f32 to vector<16x128xf32>
    %71 = arith.mulf %69, %70 : vector<16x128xf32>
    %72 = math.tanh %71 : vector<16x128xf32>
    %cst_34 = arith.constant 8.090170e-01 : f32
    %73 = vector.broadcast %cst_34 : f32 to vector<16x128xf32>
    %74 = arith.mulf %73, %72 : vector<16x128xf32>
    %cst_35 = arith.constant 8.090170e-01 : f32
    %75 = vector.broadcast %cst_35 : f32 to vector<16x128xf32>
    %76 = arith.addf %74, %75 : vector<16x128xf32>
    %cst_36 = arith.constant 6.180340e-01 : f32
    %77 = vector.broadcast %cst_36 : f32 to vector<16x128xf32>
    %78 = arith.mulf %69, %77 : vector<16x128xf32>
    %79 = math.tanh %78 : vector<16x128xf32>
    %cst_37 = arith.constant 5.000000e-01 : f32
    %80 = vector.broadcast %cst_37 : f32 to vector<16x128xf32>
    %81 = arith.mulf %80, %79 : vector<16x128xf32>
    %82 = arith.addf %76, %81 : vector<16x128xf32>
    %cst_38 = arith.constant 1.15572739 : f32
    %83 = vector.broadcast %cst_38 : f32 to vector<16x128xf32>
    %84 = arith.mulf %69, %83 : vector<16x128xf32>
    %85 = math.sin %84 : vector<16x128xf32>
    %cst_39 = arith.constant 5.000000e-01 : f32
    %86 = vector.broadcast %cst_39 : f32 to vector<16x128xf32>
    %87 = arith.mulf %86, %85 : vector<16x128xf32>
    %88 = arith.addf %82, %87 : vector<16x128xf32>
    %cst_40 = arith.constant 0.381966025 : f32
    %89 = vector.broadcast %cst_40 : f32 to vector<16x128xf32>
    %90 = arith.mulf %88, %89 : vector<16x128xf32>
    %cst_41 = arith.constant dense<0.000000e+00> : vector<16xf32>
    %91 = vector.multi_reduction <add>, %90, %cst_41 [1] : vector<16x128xf32> to vector<16xf32>
    %92 = vector.shape_cast %91 : vector<16xf32> to vector<16x1xf32>
    %cst_42 = arith.constant 33.6828537 : f32
    %93 = vector.broadcast %cst_42 : f32 to vector<16x1xf32>
    %94 = arith.subf %92, %93 : vector<16x1xf32>
    %cst_43 = arith.constant 0.0526315793 : f32
    %95 = vector.broadcast %cst_43 : f32 to vector<16x1xf32>
    %96 = arith.mulf %94, %95 : vector<16x1xf32>
    %97 = vector.broadcast %96 : vector<16x1xf32> to vector<16x128xf32>
    %98 = arith.subf %90, %97 : vector<16x128xf32>
    %cst_44 = arith.constant 3.090170e-01 : f32
    %99 = vector.broadcast %cst_44 : f32 to vector<16x1xf32>
    %100 = arith.subf %99, %96 : vector<16x1xf32>
    %101 = arith.mulf %98, %98 : vector<16x128xf32>
    %cst_45 = arith.constant dense<0.000000e+00> : vector<16xf32>
    %102 = vector.multi_reduction <add>, %101, %cst_45 [1] : vector<16x128xf32> to vector<16xf32>
    %103 = vector.shape_cast %102 : vector<16xf32> to vector<16x1xf32>
    %cst_46 = arith.constant 1.090000e+02 : f32
    %104 = vector.broadcast %cst_46 : f32 to vector<16x1xf32>
    %105 = arith.mulf %104, %100 : vector<16x1xf32>
    %106 = arith.mulf %105, %100 : vector<16x1xf32>
    %107 = arith.subf %103, %106 : vector<16x1xf32>
    %cst_47 = arith.constant 0.0526315793 : f32
    %108 = vector.broadcast %cst_47 : f32 to vector<16x1xf32>
    %109 = arith.mulf %107, %108 : vector<16x1xf32>
    %cst_48 = arith.constant 9.99999974E-6 : f32
    %110 = vector.broadcast %cst_48 : f32 to vector<16x1xf32>
    %111 = arith.addf %109, %110 : vector<16x1xf32>
    %112 = math.rsqrt %111 : vector<16x1xf32>
    %113 = vector.broadcast %112 : vector<16x1xf32> to vector<16x128xf32>
    %114 = arith.mulf %98, %113 : vector<16x128xf32>
    %115 = vector.broadcast %64 : vector<1x128xf32> to vector<16x128xf32>
    %116 = arith.mulf %114, %115 : vector<16x128xf32>
    %117 = vector.broadcast %65 : vector<1x128xf32> to vector<16x128xf32>
    %118 = arith.addf %116, %117 : vector<16x128xf32>
    %119 = arith.truncf %118 : vector<16x128xf32> to vector<16x128xbf16>
    %c0_49 = arith.constant 0 : index
    %c0_50 = arith.constant 0 : index
    %120 = vector.load %arg7[%c0_49, %c0_50] : memref<128x128xbf16, #tpu.memory_space<vmem>>, vector<128x128xbf16>
    %cst_51 = arith.constant dense<0.000000e+00> : vector<16x128xf32>
    %121 = tpu.matmul %119, %120, %cst_51 {dimension_numbers = #tpu.dot_dimension_numbers<[1], [0], [0], [1], [0, 0, 1, 1], [], []>} : vector<16x128xbf16>, vector<128x128xbf16>, vector<16x128xf32> -> vector<16x128xf32>
    %c0_52 = arith.constant 0 : index
    %c0_53 = arith.constant 0 : index
    %122 = vector.load %arg9[%c0_52, %c0_53] : memref<2x128xf32, #tpu.memory_space<vmem>>, vector<1x128xf32>
    %123 = vector.broadcast %122 : vector<1x128xf32> to vector<16x128xf32>
    %124 = arith.addf %121, %123 : vector<16x128xf32>
    %125 = arith.truncf %124 : vector<16x128xf32> to vector<16x128xbf16>
    %c0_54 = arith.constant 0 : index
    %c0_55 = arith.constant 0 : index
    %126 = vector.load %arg8[%c0_54, %c0_55] : memref<128x128xbf16, #tpu.memory_space<vmem>>, vector<128x128xbf16>
    %cst_56 = arith.constant dense<0.000000e+00> : vector<16x128xf32>
    %127 = tpu.matmul %125, %126, %cst_56 {dimension_numbers = #tpu.dot_dimension_numbers<[1], [0], [0], [1], [0, 0, 1, 1], [], []>} : vector<16x128xbf16>, vector<128x128xbf16>, vector<16x128xf32> -> vector<16x128xf32>
    %c1_57 = arith.constant 1 : index
    %c0_58 = arith.constant 0 : index
    %128 = vector.load %arg9[%c1_57, %c0_58] : memref<2x128xf32, #tpu.memory_space<vmem>>, vector<1x128xf32>
    %129 = vector.broadcast %128 : vector<1x128xf32> to vector<16x128xf32>
    %130 = arith.addf %127, %129 : vector<16x128xf32>
    %c0_59 = arith.constant 0 : index
    %c0_60 = arith.constant 0 : index
    %131 = vector.load %arg10[%c0_59, %c0_60] : memref<16x128xf32, #tpu.memory_space<vmem>>, vector<16x128xf32>
    tpu.vector_store %arg10[%c0_59, %c0_60], %130 {strides = array<i32>} : memref<16x128xf32, #tpu.memory_space<vmem>>, vector<16x128xf32>,
    return
  }
  func.func @transform_0(%arg0: i32) -> i32 {
    %c0_i32 = arith.constant 0 : i32
    %c0_i32_0 = arith.constant 0 : i32
    return %c0_i32 : i32
  }
  func.func @transform_1(%arg0: i32) -> (i32, i32) {
    %c0_i32 = arith.constant 0 : i32
    %c0_i32_0 = arith.constant 0 : i32
    return %arg0, %c0_i32 : i32, i32
  }
  func.func @transform_2(%arg0: i32) -> (i32, i32) {
    %c0_i32 = arith.constant 0 : i32
    %c0_i32_0 = arith.constant 0 : i32
    %c0_i32_1 = arith.constant 0 : i32
    return %c0_i32, %c0_i32_0 : i32, i32
  }
  func.func @transform_3(%arg0: i32) -> (i32, i32) {
    %c0_i32 = arith.constant 0 : i32
    %c0_i32_0 = arith.constant 0 : i32
    %c0_i32_1 = arith.constant 0 : i32
    return %c0_i32, %c0_i32_0 : i32, i32
  }
  func.func @transform_4(%arg0: i32) -> (i32, i32) {
    %c0_i32 = arith.constant 0 : i32
    %c0_i32_0 = arith.constant 0 : i32
    %c0_i32_1 = arith.constant 0 : i32
    return %c0_i32, %c0_i32_0 : i32, i32
  }
  func.func @transform_5(%arg0: i32) -> (i32, i32) {
    %c0_i32 = arith.constant 0 : i32
    %c0_i32_0 = arith.constant 0 : i32
    %c0_i32_1 = arith.constant 0 : i32
    return %c0_i32, %c0_i32_0 : i32, i32
  }
  func.func @transform_6(%arg0: i32) -> (i32, i32) {
    %c0_i32 = arith.constant 0 : i32
    %c0_i32_0 = arith.constant 0 : i32
    %c0_i32_1 = arith.constant 0 : i32
    return %c0_i32, %c0_i32_0 : i32, i32
  }
  func.func @transform_7(%arg0: i32) -> (i32, i32) {
    %c0_i32 = arith.constant 0 : i32
    %c0_i32_0 = arith.constant 0 : i32
    %c0_i32_1 = arith.constant 0 : i32
    return %c0_i32, %c0_i32_0 : i32, i32
  }
  func.func @transform_8(%arg0: i32) -> (i32, i32) {
    %c0_i32 = arith.constant 0 : i32
    %c0_i32_0 = arith.constant 0 : i32
    %c0_i32_1 = arith.constant 0 : i32
    return %c0_i32, %c0_i32_0 : i32, i32
  }
  func.func @transform_9(%arg0: i32) -> (i32, i32) {
    %c0_i32 = arith.constant 0 : i32
    %c0_i32_0 = arith.constant 0 : i32
    return %arg0, %c0_i32 : i32, i32
  }
}

</mosaic_0001>

<llo_original>
// kernel: tpu_custom_call.1
$region0: #{tpu_custom_call.1}
  #allocation0 [shape = 'u32[]', space=smem, size = 0x4, offset = 0x4, fixed_abs, tag = 'smem constant byte address 0x4 - core index']
  #allocation1 [shape = 'u32[144,128]{1,0:T(1,128)}', space=vmem, size = 0x12000, scoped, tag = 'internal scratch']
  #allocation2 [shape = 'f32[1]{0:T(128)S(6)}', space=smem, size = 0x200, scoped, tag = 'scoped memory for tpu_custom_call.1']
  %s0 = inlined_call_operand.<no memory space> [shape: f32[1], index: 0, kind: input, shape index: {}]
  %s1 = inlined_call_operand.hbm [shape: bf16[16,128], index: 1, kind: input, shape index: {}]
  %s2 = inlined_call_operand.hbm [shape: bf16[128,128], index: 2, kind: input, shape index: {}]
  %s3 = inlined_call_operand.vmem [shape: f32[3,128], index: 3, kind: input, shape index: {}]
  %s4 = inlined_call_operand.hbm [shape: bf16[128,128], index: 4, kind: input, shape index: {}]
  %s5 = inlined_call_operand.vmem [shape: f32[3,128], index: 5, kind: input, shape index: {}]
  %s6 = inlined_call_operand.hbm [shape: bf16[128,128], index: 6, kind: input, shape index: {}]
  %s7 = inlined_call_operand.hbm [shape: bf16[128,128], index: 7, kind: input, shape index: {}]
  %s8 = inlined_call_operand.vmem [shape: f32[2,128], index: 8, kind: input, shape index: {}]
  %s9 = inlined_call_operand.hbm [shape: f32[16,128], index: 9, kind: output, shape index: {}]
  %s10 = sld [smem:[#allocation0]]
  $region66: #{tpu_custom_call.1} parent=0
    _
  %s12 = ssub.s32 1, %s10
  %s13 = scalar_select 0, %s12, %s10
  %14 = sst [smem:[#allocation2]] %s0
  $region1: #{tpu_custom_call.1} parent=0
    #allocation3 [shape = 'u8[4096]{0}', space=vmem, size = 0x1000, scoped, tag = 'input window, operand 1, single buffered']
    #allocation4 [shape = 's32[1]{0}', space=sflag, size = 0x4, scoped, tag = 'scoped memory for tpu_custom_call.1']
    #allocation5 [shape = 's32[1]{0}', space=sflag, size = 0x4, scoped, tag = 'scoped memory for tpu_custom_call.1']
    #allocation6 [shape = 'u8[32768]{0}', space=vmem, size = 0x8000, scoped, tag = 'input window, operand 2, single buffered']
    #allocation7 [shape = 's32[1]{0}', space=sflag, size = 0x4, scoped, tag = 'scoped memory for tpu_custom_call.1']
    #allocation8 [shape = 'u8[32768]{0}', space=vmem, size = 0x8000, scoped, tag = 'input window, operand 4, single buffered']
    #allocation9 [shape = 'u8[32768]{0}', space=vmem, size = 0x8000, scoped, tag = 'input window, operand 6, single buffered']
    #allocation10 [shape = 's32[1]{0}', space=sflag, size = 0x4, scoped, tag = 'scoped memory for tpu_custom_call.1']
    #allocation11 [shape = 'u8[32768]{0}', space=vmem, size = 0x8000, scoped, tag = 'input window, operand 7, single buffered']
    #allocation12 [shape = 'u8[8192]{0}', space=vmem, size = 0x2000, scoped, tag = 'output window, operand 0, single buffered']
    %15 = vsyncpa [#allocation4], 0
    %16 = vsyncpa [#allocation7], 0
    %17 = vsyncpa [#allocation10], 0
    %18 = vsyncpa [#allocation5], 0
    // Predicated region
    $region2: #{tpu_custom_call.1} parent=1 // pred_check
      _
    $region3: #{tpu_custom_call.1} parent=1 // pred_check_branch
      %20 = sbr.rel (0) target = $region5
    $region4: #{tpu_custom_call.1} parent=1 // pred_region
      _
    $region5: #{tpu_custom_call.1} parent=1 // pred_fallthru
      _
    // Predicated region
    $region6: #{tpu_custom_call.1} parent=1 // pred_check
      _
    $region7: #{tpu_custom_call.1} parent=1 // pred_check_branch
      %22 = sbr.rel (0) target = $region9
    $region8: #{tpu_custom_call.1} parent=1 // pred_region
      %s24 = ssub.s32 128, 128
      %25 = vsyncadd [#allocation4], %s24
      %s26 = sshll.u32 [#allocation3], 4
      %s27 = int_to_ptr.vmem [resolvable:$true] %s26
      %32 = dma.hbm_to_vmem [thread:$0]  %s1, 128, %s27, [#allocation4], 64, 64, 4
    $region9: #{tpu_custom_call.1} parent=1 // pred_fallthru
      _
    // Predicated region
    $region10: #{tpu_custom_call.1} parent=1 // pred_check
      _
    $region11: #{tpu_custom_call.1} parent=1 // pred_check_branch
      %34 = sbr.rel (0) target = $region13
    $region12: #{tpu_custom_call.1} parent=1 // pred_region
      %s36 = ssub.s32 1024, 1024
      %37 = vsyncadd [#allocation7], %s36
      %s38 = sshll.u32 [#allocation6], 4
      %s39 = int_to_ptr.vmem [resolvable:$true] %s38
      %44 = dma.hbm_to_vmem [thread:$0]  %s2, 1024, %s39, [#allocation7], 64, 64, 4
    $region13: #{tpu_custom_call.1} parent=1 // pred_fallthru
      _
    // Predicated region
    $region14: #{tpu_custom_call.1} parent=1 // pred_check
      _
    $region15: #{tpu_custom_call.1} parent=1 // pred_check_branch
      %46 = sbr.rel (0) target = $region17
    $region16: #{tpu_custom_call.1} parent=1 // pred_region
      _
    $region17: #{tpu_custom_call.1} parent=1 // pred_fallthru
      _
    // Predicated region
    $region18: #{tpu_custom_call.1} parent=1 // pred_check
      _
    $region19: #{tpu_custom_call.1} parent=1 // pred_check_branch
      %48 = sbr.rel (0) target = $region21
    $region20: #{tpu_custom_call.1} parent=1 // pred_region
      %s50 = ssub.s32 1024, 1024
      %51 = vsyncadd [#allocation7], %s50
      %s52 = sshll.u32 [#allocation8], 4
      %s53 = int_to_ptr.vmem [resolvable:$true] %s52
      %58 = dma.hbm_to_vmem [thread:$0]  %s4, 1024, %s53, [#allocation7], 64, 64, 4
    $region21: #{tpu_custom_call.1} parent=1 // pred_fallthru
      _
    // Predicated region
    $region22: #{tpu_custom_call.1} parent=1 // pred_check
      _
    $region23: #{tpu_custom_call.1} parent=1 // pred_check_branch
      %60 = sbr.rel (0) target = $region25
    $region24: #{tpu_custom_call.1} parent=1 // pred_region
      _
    $region25: #{tpu_custom_call.1} parent=1 // pred_fallthru
      _
    // Predicated region
    $region26: #{tpu_custom_call.1} parent=1 // pred_check
      _
    $region27: #{tpu_custom_call.1} parent=1 // pred_check_branch
      %62 = sbr.rel (0) target = $region29
    $region28: #{tpu_custom_call.1} parent=1 // pred_region
      %s64 = ssub.s32 1024, 1024
      %65 = vsyncadd [#allocation10], %s64
      %s66 = sshll.u32 [#allocation9], 4
      %s67 = int_to_ptr.vmem [resolvable:$true] %s66
      %72 = dma.hbm_to_vmem [thread:$0]  %s6, 1024, %s67, [#allocation10], 64, 64, 4
    $region29: #{tpu_custom_call.1} parent=1 // pred_fallthru
      _
    // Predicated region
    $region30: #{tpu_custom_call.1} parent=1 // pred_check
      _
    $region31: #{tpu_custom_call.1} parent=1 // pred_check_branch
      %74 = sbr.rel (0) target = $region33
    $region32: #{tpu_custom_call.1} parent=1 // pred_region
      %s76 = ssub.s32 1024, 1024
      %77 = vsyncadd [#allocation10], %s76
      %s78 = sshll.u32 [#allocation11], 4
      %s79 = int_to_ptr.vmem [resolvable:$true] %s78
      %84 = dma.hbm_to_vmem [thread:$0]  %s7, 1024, %s79, [#allocation10], 64, 64, 4
    $region33: #{tpu_custom_call.1} parent=1 // pred_fallthru
      _
    // Predicated region
    $region34: #{tpu_custom_call.1} parent=1 // pred_check
      _
    $region35: #{tpu_custom_call.1} parent=1 // pred_check_branch
      %86 = sbr.rel (0) target = $region37
    $region36: #{tpu_custom_call.1} parent=1 // pred_region
      _
    $region37: #{tpu_custom_call.1} parent=1 // pred_fallthru
      _
    // Predicated region
    $region38: #{tpu_custom_call.1} parent=1 // pred_check
      _
    $region39: #{tpu_custom_call.1} parent=1 // pred_check_branch
      %88 = sbr.rel (0) target = $region41
    $region40: #{tpu_custom_call.1} parent=1 // pred_region
      %89 = dma.done [#allocation4], 128
    $region41: #{tpu_custom_call.1} parent=1 // pred_fallthru
      _
    // Predicated region
    $region42: #{tpu_custom_call.1} parent=1 // pred_check
      _
    $region43: #{tpu_custom_call.1} parent=1 // pred_check_branch
      %91 = sbr.rel (0) target = $region45
    $region44: #{tpu_custom_call.1} parent=1 // pred_region
      %92 = dma.done [#allocation7], 1024
    $region45: #{tpu_custom_call.1} parent=1 // pred_fallthru
      _
    // Predicated region
    $region46: #{tpu_custom_call.1} parent=1 // pred_check
      _
    $region47: #{tpu_custom_call.1} parent=1 // pred_check_branch
      %94 = sbr.rel (0) target = $region49
    $region48: #{tpu_custom_call.1} parent=1 // pred_region
      %95 = dma.done [#allocation7], 1024
    $region49: #{tpu_custom_call.1} parent=1 // pred_fallthru
      _
    // Predicated region
    $region50: #{tpu_custom_call.1} parent=1 // pred_check
      _
    $region51: #{tpu_custom_call.1} parent=1 // pred_check_branch
      %97 = sbr.rel (0) target = $region53
    $region52: #{tpu_custom_call.1} parent=1 // pred_region
      %98 = dma.done [#allocation10], 1024
    $region53: #{tpu_custom_call.1} parent=1 // pred_fallthru
      _
    // Predicated region
    $region54: #{tpu_custom_call.1} parent=1 // pred_check
      _
    $region55: #{tpu_custom_call.1} parent=1 // pred_check_branch
      %100 = sbr.rel (0) target = $region57
    $region56: #{tpu_custom_call.1} parent=1 // pred_region
      %101 = dma.done [#allocation10], 1024
    $region57: #{tpu_custom_call.1} parent=1 // pred_fallthru
      _
    %v103 = vld [vmem:[#allocation3] sm:$0xf]
    %v104 = vld [vmem:[#allocation3 + $0x4] sm:$0xf]
    %v105 = vunpack.c.l.bf16 %v103
    %v106 = vunpack.c.l.bf16 %v104
    %s107 = sld [smem:[#allocation2]]
    %v108 = vstv %s107
    %v109 = vmul.f32 %v105, %v108
    %v110 = vmul.f32 %v106, %v108
    %v111 = vpack.c.bf16 %v110, %v109
    %v112 = vld [vmem:[%s3] sm:$0x1]
    %v113 = vld [vmem:[%s3 + $0x1] sm:$0x1]
    %v114 = vld [vmem:[%s3 + $0x2] sm:$0x1]
    %v115 = vld [vmem:[#allocation6] sm:$0xf]
    %v116 = vld [vmem:[#allocation6 + $0x4] sm:$0xf]
    %v117 = vld [vmem:[#allocation6 + $0x8] sm:$0xf]
    %v118 = vld [vmem:[#allocation6 + $0xc] sm:$0xf]
    %v119 = vld [vmem:[#allocation6 + $0x10] sm:$0xf]
    %v120 = vld [vmem:[#allocation6 + $0x14] sm:$0xf]
    %v121 = vld [vmem:[#allocation6 + $0x18] sm:$0xf]
    %v122 = vld [vmem:[#allocation6 + $0x1c] sm:$0xf]
    %v123 = vld [vmem:[#allocation6 + $0x20] sm:$0xf]
    %v124 = vld [vmem:[#allocation6 + $0x24] sm:$0xf]
    %v125 = vld [vmem:[#allocation6 + $0x28] sm:$0xf]
    %v126 = vld [vmem:[#allocation6 + $0x2c] sm:$0xf]
    %v127 = vld [vmem:[#allocation6 + $0x30] sm:$0xf]
    %v128 = vld [vmem:[#allocation6 + $0x34] sm:$0xf]
    %v129 = vld [vmem:[#allocation6 + $0x38] sm:$0xf]
    %v130 = vld [vmem:[#allocation6 + $0x3c] sm:$0xf]
    %v131 = vlaneseq
    %v132 = vshrl.u32 %v131, 7
    %v133 = vsub.s32 0, %v132
    %v134 = vrot.slane %v112, %v133
    %v151 = vunpack.c.l.b16 %v115
    %v152 = vunpack.c.l.b16 %v116
    %v153 = vunpack.c.l.b16 %v117
    %v154 = vunpack.c.l.b16 %v118
    %v155 = vunpack.c.l.b16 %v119
    %v156 = vunpack.c.l.b16 %v120
    %v157 = vunpack.c.l.b16 %v121
    %v158 = vunpack.c.l.b16 %v122
    %v159 = vunpack.c.l.b16 %v123
    %v160 = vunpack.c.l.b16 %v124
    %v161 = vunpack.c.l.b16 %v125
    %v162 = vunpack.c.l.b16 %v126
    %v163 = vunpack.c.l.b16 %v127
    %v164 = vunpack.c.l.b16 %v128
    %v165 = vunpack.c.l.b16 %v129
    %v166 = vunpack.c.l.b16 %v130
    %v167 = vpack.c.b16 %v152, %v151
    %v168 = vpack.c.b16 %v154, %v153
    %v169 = vpack.c.b16 %v156, %v155
    %v170 = vpack.c.b16 %v158, %v157
    %v171 = vpack.c.b16 %v160, %v159
    %v172 = vpack.c.b16 %v162, %v161
    %v173 = vpack.c.b16 %v164, %v163
    %v174 = vpack.c.b16 %v166, %v165
    %183 = vmatprep.subr.bf16.mxu0 0
    %184 = vmatpush1.bf16.msra.mxu0 %v174
    %185 = vmatprep.subr.bf16.mxu0 0
    %186 = vmatpush1.bf16.msra.mxu0 %v173
    %187 = vmatprep.subr.bf16.mxu0 0
    %188 = vmatpush1.bf16.msra.mxu0 %v172
    %189 = vmatprep.subr.bf16.mxu0 0
    %190 = vmatpush1.bf16.msra.mxu0 %v171
    %191 = vmatprep.subr.bf16.mxu0 0
    %192 = vmatpush1.bf16.msra.mxu0 %v170
    %193 = vmatprep.subr.bf16.mxu0 0
    %194 = vmatpush1.bf16.msra.mxu0 %v169
    %195 = vmatprep.subr.bf16.mxu0 0
    %196 = vmatpush1.bf16.msra.mxu0 %v168
    %197 = vmatprep.subr.bf16.mxu0 0
    %198 = vmatpush1.bf16.msra.mxu0 %v167
    %199 = vmatprep.subr.bf16.mxu0 0
    %200 = vmatpush2.bf16.msra.mxu0 0
    %201 = vmatprep.subr.bf16.mxu0 0
    %202 = vmatpush2.bf16.msra.mxu0 0
    %203 = vmatprep.subr.bf16.mxu0 0
    %204 = vmatpush2.bf16.msra.mxu0 0
    %205 = vmatprep.subr.bf16.mxu0 0
    %206 = vmatpush2.bf16.msra.mxu0 0
    %207 = vmatprep.subr.bf16.mxu0 0
    %208 = vmatpush2.bf16.msra.mxu0 0
    %209 = vmatprep.subr.bf16.mxu0 0
    %210 = vmatpush2.bf16.msra.mxu0 0
    %211 = vmatprep.subr.bf16.mxu0 0
    %212 = vmatpush2.bf16.msra.mxu0 0
    %213 = vmatprep.subr.bf16.mxu0 0
    %214 = vmatpush2.bf16.msra.mxu0 0
    %215 = vmatprep.mubr.bf16.mxu0 0
    %216 = vmatmul.mubr.bf16.gmra.mxu0 %v111
    %v217 = vpop.f32.mrf.mxu0
    %v218 = vadd.f32 %v134, %v217
    %v219 = vpop.f32.mrf.mxu0
    %v220 = vpop.f32.mrf.mxu0
    %v221 = vadd.f32 %v134, %v220
    %v222 = vpop.f32.mrf.mxu0
    %223 = vdwg.mxu0
    %v224 = vmul.f32 %v218, 0.809017
    %v225 = vmul.f32 %v221, 0.809017
    %v226 = vtanh.pop %v224
    %v227 = vtanh.pop %v225
    %v228 = vmul.f32 %v226, 0.809017
    %v229 = vmul.f32 %v227, 0.809017
    %v230 = vadd.f32 %v228, 0.809017
    %v231 = vadd.f32 %v229, 0.809017
    %v232 = vmul.f32 %v218, 0.618034
    %v233 = vmul.f32 %v221, 0.618034
    %v234 = vtanh.pop %v232
    %v235 = vtanh.pop %v233
    %v236 = vmul.f32 %v234, 0.5
    %v237 = vmul.f32 %v235, 0.5
    %v238 = vadd.f32 %v230, %v236
    %v239 = vadd.f32 %v231, %v237
    %v240 = vmul.f32 %v218, 1.1557274
    %v241 = vmul.f32 %v221, 1.1557274
    %v242 = vand.u32 2147483647, %v240
    %vm243 = vcmp.le.f32.partialorder %v242, 0.7853982
    %vm244 = vcmp.lt.s32.totalorder %v240, 0
    %v245 = vand.u32 %v240, 2139095040
    %v246 = vshrl.u32 %v245, 23
    %v247 = vsub.s32 %v246, 127
    %v248 = vand.u32 2147483647, %v240
    %v249 = vand.u32 %v248, 8388607
    %v250 = vor.u32 %v249, 8388608
    %v251 = vsub.s32 0, %v250
    %v252 = vadd.s32 %v247, 1
    %vm253 = vcmp.gt.s32.totalorder %v252, 0
    %v254 = vsel %vm253, %v252, 0
    %v255 = vshrl.u32 %v254, 5
    %v256 = vand.u32 %v254, 31
    %v257 = vsub.s32 32, %v256
    %v258 = vshrl.u32 683565275, %v257
    %v259 = vshll.u32 683565275, %v256
    %v260 = vshrl.u32 2475754826, %v257
    %v261 = vor.u32 %v259, %v260
    %v262 = vshll.u32 2475754826, %v256
    %v263 = vshrl.u32 2131351028, %v257
    %v264 = vor.u32 %v262, %v263
    %v265 = vshll.u32 2131351028, %v256
    %v266 = vshrl.u32 2102212464, %v257
    %v267 = vor.u32 %v265, %v266
    %v268 = vshll.u32 2102212464, %v256
    %v269 = vshrl.u32 920167782, %v257
    %v270 = vor.u32 %v268, %v269
    %v271 = vshll.u32 920167782, %v256
    %v272 = vshrl.u32 1326507024, %v257
    %v273 = vor.u32 %v271, %v272
    %vm274 = vcmp.lt.s32.totalorder %v255, 1
    %vm275 = vcmp.lt.s32.totalorder %v255, 2
    %vm276 = vcmp.lt.s32.totalorder %v255, 3
    %vm277 = vcmp.lt.s32.totalorder %v255, 4
    %v278 = vsel %vm274, %v258, %v261
    %v279 = vsel %vm277, %v267, 2102212464
    %v280 = vsel %vm276, %v264, %v279
    %v281 = vsel %vm275, %v278, %v280
    %v282 = vsel %vm274, %v261, %v264
    %v283 = vsel %vm277, %v270, 920167782
    %v284 = vsel %vm276, %v267, %v283
    %v285 = vsel %vm275, %v282, %v284
    %v286 = vsel %vm274, %v264, %v267
    %v287 = vsel %vm277, %v273, 1326507024
    %v288 = vsel %vm276, %v270, %v287
    %v289 = vsel %vm275, %v286, %v288
    %v290 = vshll.u32 %v250, 8
    %v291 = vmul.u32.u64.compose %v290, %v289
    %v292 = vextract.low.u32 %v291
    %v293 = vextract.high.u32 %v291
    %v294 = vmul.u32.u64.compose %v290, %v285
    %v295 = vextract.low.u32 %v294
    %v296 = vextract.high.u32 %v294
    %v297 = vmul.u32 %v290, %v281
    %v298 = vadd.s32 %v293, %v295
    %vm299 = vc.u32 %v293, %v295
    %v300 = vadd.s32 %v296, 1
    %v301 = vsel %vm299, %v300, %v296
    %v302 = vadd.s32 %v297, %v301
    %v303 = vadd.s32 %v302, 536870912
    %v304 = vshrl.u32 %v303, 30
    %v305 = vshll.u32 %v304, 30
    %v306 = vsub.s32 %v302, %v305
    %vm307 = vcmp.lt.s32.totalorder %v306, 0
    %v308 = vsub.s32 0, %v306
    %v309 = vsel %vm307, %v308, %v306
    %v310 = vclz %v309
    %v311 = vsub.s32 %v310, 2
    %vm312 = vcmp.gt.s32.totalorder 0, %v311
    %v313 = vsel %vm312, 0, %v311
    %v314 = vsub.s32 32, %v313
    %v315 = vshll.u32 %v306, %v313
    %v316 = vshrl.u32 %v298, %v314
    %v317 = vor.u32 %v315, %v316
    %v318 = vsub.s32 4294967266, %v313
    %v319 = vadd.s32 %v318, 127
    %v320 = vshll.u32 %v319, 23
    %v321 = vor.u32 4788187, %v320
    %v322 = vand.u32 2147483647, %v321
    %v324 = vcvt.s32.f32 %v317
    %v325 = vmul.f32 %v324, %v322
    %v326 = vxor.u32 %v325, 2147483648
    %v327 = vsel %vm244, %v326, %v325
    %v328 = vsub.s32 4, %v304
    %v329 = vsel %vm244, %v328, %v304
    %v330 = vsel %vm243, %v240, %v327
    %v331 = vsel %vm243, 0, %v329
    %v332 = vcosq.f32.pop %v330
    %v333 = vsinq.f32.pop %v330
    %vm334 = vweird.f32 %v240
    %v335 = vadd.s32 %v331, 3
    %v336 = vand.u32 %v335, 3
    %vm337 = vcmp.lt.s32.totalorder %v336, 2
    %vm338 = vcmp.eq.s32.totalorder %v336, 0
    %v339 = vxor.u32 %v333, 2147483648
    %v340 = vsel %vm338, %v332, %v339
    %vm341 = vcmp.eq.s32.totalorder %v336, 2
    %v342 = vxor.u32 %v332, 2147483648
    %v343 = vsel %vm341, %v342, %v333
    %v344 = vsel %vm337, %v340, %v343
    %v345 = vsel %vm334, nan, %v344
    %v346 = vand.u32 2147483647, %v241
    %vm347 = vcmp.le.f32.partialorder %v346, 0.7853982
    %vm348 = vcmp.lt.s32.totalorder %v241, 0
    %v349 = vand.u32 %v241, 2139095040
    %v350 = vshrl.u32 %v349, 23
    %v351 = vsub.s32 %v350, 127
    %v352 = vand.u32 2147483647, %v241
    %v353 = vand.u32 %v352, 8388607
    %v354 = vor.u32 %v353, 8388608
    %v355 = vsub.s32 0, %v354
    %v356 = vadd.s32 %v351, 1
    %vm357 = vcmp.gt.s32.totalorder %v356, 0
    %v358 = vsel %vm357, %v356, 0
    %v359 = vshrl.u32 %v358, 5
    %v360 = vand.u32 %v358, 31
    %v361 = vsub.s32 32, %v360
    %v362 = vshrl.u32 683565275, %v361
    %v363 = vshll.u32 683565275, %v360
    %v364 = vshrl.u32 2475754826, %v361
    %v365 = vor.u32 %v363, %v364
    %v366 = vshll.u32 2475754826, %v360
    %v367 = vshrl.u32 2131351028, %v361
    %v368 = vor.u32 %v366, %v367
    %v369 = vshll.u32 2131351028, %v360
    %v370 = vshrl.u32 2102212464, %v361
    %v371 = vor.u32 %v369, %v370
    %v372 = vshll.u32 2102212464, %v360
    %v373 = vshrl.u32 920167782, %v361
    %v374 = vor.u32 %v372, %v373
    %v375 = vshll.u32 920167782, %v360
    %v376 = vshrl.u32 1326507024, %v361
    %v377 = vor.u32 %v375, %v376
    %vm378 = vcmp.lt.s32.totalorder %v359, 1
    %vm379 = vcmp.lt.s32.totalorder %v359, 2
    %vm380 = vcmp.lt.s32.totalorder %v359, 3
    %vm381 = vcmp.lt.s32.totalorder %v359, 4
    %v382 = vsel %vm378, %v362, %v365
    %v383 = vsel %vm381, %v371, 2102212464
    %v384 = vsel %vm380, %v368, %v383
    %v385 = vsel %vm379, %v382, %v384
    %v386 = vsel %vm378, %v365, %v368
    %v387 = vsel %vm381, %v374, 920167782
    %v388 = vsel %vm380, %v371, %v387
    %v389 = vsel %vm379, %v386, %v388
    %v390 = vsel %vm378, %v368, %v371
    %v391 = vsel %vm381, %v377, 1326507024
    %v392 = vsel %vm380, %v374, %v391
    %v393 = vsel %vm379, %v390, %v392
    %v394 = vshll.u32 %v354, 8
    %v395 = vmul.u32.u64.compose %v394, %v393
    %v396 = vextract.low.u32 %v395
    %v397 = vextract.high.u32 %v395
    %v398 = vmul.u32.u64.compose %v394, %v389
    %v399 = vextract.low.u32 %v398
    %v400 = vextract.high.u32 %v398
    %v401 = vmul.u32 %v394, %v385
    %v402 = vadd.s32 %v397, %v399
    %vm403 = vc.u32 %v397, %v399
    %v404 = vadd.s32 %v400, 1
    %v405 = vsel %vm403, %v404, %v400
    %v406 = vadd.s32 %v401, %v405
    %v407 = vadd.s32 %v406, 536870912
    %v408 = vshrl.u32 %v407, 30
    %v409 = vshll.u32 %v408, 30
    %v410 = vsub.s32 %v406, %v409
    %vm411 = vcmp.lt.s32.totalorder %v410, 0
    %v412 = vsub.s32 0, %v410
    %v413 = vsel %vm411, %v412, %v410
    %v414 = vclz %v413
    %v415 = vsub.s32 %v414, 2
    %vm416 = vcmp.gt.s32.totalorder 0, %v415
    %v417 = vsel %vm416, 0, %v415
    %v418 = vsub.s32 32, %v417
    %v419 = vshll.u32 %v410, %v417
    %v420 = vshrl.u32 %v402, %v418
    %v421 = vor.u32 %v419, %v420
    %v422 = vsub.s32 4294967266, %v417
    %v423 = vadd.s32 %v422, 127
    %v424 = vshll.u32 %v423, 23
    %v425 = vor.u32 4788187, %v424
    %v426 = vand.u32 2147483647, %v425
    %v428 = vcvt.s32.f32 %v421
    %v429 = vmul.f32 %v428, %v426
    %v430 = vxor.u32 %v429, 2147483648
    %v431 = vsel %vm348, %v430, %v429
    %v432 = vsub.s32 4, %v408
    %v433 = vsel %vm348, %v432, %v408
    %v434 = vsel %vm347, %v241, %v431
    %v435 = vsel %vm347, 0, %v433
    %v436 = vcosq.f32.pop %v434
    %v437 = vsinq.f32.pop %v434
    %vm438 = vweird.f32 %v241
    %v439 = vadd.s32 %v435, 3
    %v440 = vand.u32 %v439, 3
    %vm441 = vcmp.lt.s32.totalorder %v440, 2
    %vm442 = vcmp.eq.s32.totalorder %v440, 0
    %v443 = vxor.u32 %v437, 2147483648
    %v444 = vsel %vm442, %v436, %v443
    %vm445 = vcmp.eq.s32.totalorder %v440, 2
    %v446 = vxor.u32 %v436, 2147483648
    %v447 = vsel %vm445, %v446, %v437
    %v448 = vsel %vm441, %v444, %v447
    %v449 = vsel %vm438, nan, %v448
    %v450 = vmul.f32 %v345, 0.5
    %v451 = vmul.f32 %v449, 0.5
    %v452 = vadd.f32 %v238, %v450
    %v453 = vadd.f32 %v239, %v451
    %v454 = vmul.f32 %v452, 0.38196602
    %v455 = vmul.f32 %v453, 0.38196602
    %456 = vadd.xlane.f32.xlu0 %v454
    %v457 = vpop.xlane.xlu0 %456
    %458 = vadd.xlane.f32.xlu0 %v455
    %v459 = vpop.xlane.xlu0 %458
    %v460 = vsub.f32 %v457, 23.79431
    %v461 = vsub.f32 %v459, 23.79431
    %v462 = vmul.f32 %v460, 0.019607844
    %v463 = vmul.f32 %v461, 0.019607844
    %v464 = vsub.f32 %v454, %v462
    %v465 = vsub.f32 %v455, %v463
    %v466 = vsub.f32 0.309017, %v462
    %v467 = vsub.f32 0.309017, %v463
    %v468 = vmul.f32 %v464, %v464
    %v469 = vmul.f32 %v465, %v465
    %470 = vadd.xlane.f32.xlu0 %v468
    %v471 = vpop.xlane.xlu0 %470
    %472 = vadd.xlane.f32.xlu0 %v469
    %v473 = vpop.xlane.xlu0 %472
    %v474 = vmul.f32 %v466, 77.0
    %v475 = vmul.f32 %v467, 77.0
    %v476 = vmul.f32 %v474, %v466
    %v477 = vmul.f32 %v475, %v467
    %v478 = vsub.f32 %v471, %v476
    %v479 = vsub.f32 %v473, %v477
    %v480 = vmul.f32 %v478, 0.019607844
    %v481 = vmul.f32 %v479, 0.019607844
    %v482 = vadd.f32 %v480, 1e-05
    %v483 = vadd.f32 %v481, 1e-05
    %v484 = vrsqrt.pop %v482
    %v485 = vrsqrt.pop %v483
    %v486 = vmul.f32 %v464, %v484
    %v487 = vmul.f32 %v465, %v485
    %v488 = vlaneseq
    %v489 = vshrl.u32 %v488, 7
    %v490 = vsub.s32 0, %v489
    %v491 = vrot.slane %v113, %v490
    %v492 = vmul.f32 %v486, %v491
    %v493 = vmul.f32 %v487, %v491
    %v494 = vlaneseq
    %v495 = vshrl.u32 %v494, 7
    %v496 = vsub.s32 0, %v495
    %v497 = vrot.slane %v114, %v496
    %v498 = vadd.f32 %v492, %v497
    %v499 = vadd.f32 %v493, %v497
    %v500 = vpack.c.bf16 %v499, %v498
    %v501 = vld [vmem:[%s5] sm:$0x1]
    %v502 = vld [vmem:[%s5 + $0x1] sm:$0x1]
    %v503 = vld [vmem:[%s5 + $0x2] sm:$0x1]
    %v504 = vld [vmem:[#allocation8] sm:$0xf]
    %v505 = vld [vmem:[#allocation8 + $0x4] sm:$0xf]
    %v506 = vld [vmem:[#allocation8 + $0x8] sm:$0xf]
    %v507 = vld [vmem:[#allocation8 + $0xc] sm:$0xf]
    %v508 = vld [vmem:[#allocation8 + $0x10] sm:$0xf]
    %v509 = vld [vmem:[#allocation8 + $0x14] sm:$0xf]
    %v510 = vld [vmem:[#allocation8 + $0x18] sm:$0xf]
    %v511 = vld [vmem:[#allocation8 + $0x1c] sm:$0xf]
    %v512 = vld [vmem:[#allocation8 + $0x20] sm:$0xf]
    %v513 = vld [vmem:[#allocation8 + $0x24] sm:$0xf]
    %v514 = vld [vmem:[#allocation8 + $0x28] sm:$0xf]
    %v515 = vld [vmem:[#allocation8 + $0x2c] sm:$0xf]
    %v516 = vld [vmem:[#allocation8 + $0x30] sm:$0xf]
    %v517 = vld [vmem:[#allocation8 + $0x34] sm:$0xf]
    %v518 = vld [vmem:[#allocation8 + $0x38] sm:$0xf]
    %v519 = vld [vmem:[#allocation8 + $0x3c] sm:$0xf]
    %v520 = vlaneseq
    %v521 = vshrl.u32 %v520, 7
    %v522 = vsub.s32 0, %v521
    %v523 = vrot.slane %v501, %v522
    %v540 = vunpack.c.l.b16 %v504
    %v541 = vunpack.c.l.b16 %v505
    %v542 = vunpack.c.l.b16 %v506
    %v543 = vunpack.c.l.b16 %v507
    %v544 = vunpack.c.l.b16 %v508
    %v545 = vunpack.c.l.b16 %v509
    %v546 = vunpack.c.l.b16 %v510
    %v547 = vunpack.c.l.b16 %v511
    %v548 = vunpack.c.l.b16 %v512
    %v549 = vunpack.c.l.b16 %v513
    %v550 = vunpack.c.l.b16 %v514
    %v551 = vunpack.c.l.b16 %v515
    %v552 = vunpack.c.l.b16 %v516
    %v553 = vunpack.c.l.b16 %v517
    %v554 = vunpack.c.l.b16 %v518
    %v555 = vunpack.c.l.b16 %v519
    %v556 = vpack.c.b16 %v541, %v540
    %v557 = vpack.c.b16 %v543, %v542
    %v558 = vpack.c.b16 %v545, %v544
    %v559 = vpack.c.b16 %v547, %v546
    %v560 = vpack.c.b16 %v549, %v548
    %v561 = vpack.c.b16 %v551, %v550
    %v562 = vpack.c.b16 %v553, %v552
    %v563 = vpack.c.b16 %v555, %v554
    %572 = vmatprep.subr.bf16.mxu0 0
    %573 = vmatpush1.bf16.msra.mxu0 %v563
    %574 = vmatprep.subr.bf16.mxu0 0
    %575 = vmatpush1.bf16.msra.mxu0 %v562
    %576 = vmatprep.subr.bf16.mxu0 0
    %577 = vmatpush1.bf16.msra.mxu0 %v561
    %578 = vmatprep.subr.bf16.mxu0 0
    %579 = vmatpush1.bf16.msra.mxu0 %v560
    %580 = vmatprep.subr.bf16.mxu0 0
    %581 = vmatpush1.bf16.msra.mxu0 %v559
    %582 = vmatprep.subr.bf16.mxu0 0
    %583 = vmatpush1.bf16.msra.mxu0 %v558
    %584 = vmatprep.subr.bf16.mxu0 0
    %585 = vmatpush1.bf16.msra.mxu0 %v557
    %586 = vmatprep.subr.bf16.mxu0 0
    %587 = vmatpush1.bf16.msra.mxu0 %v556
    %588 = vmatprep.subr.bf16.mxu0 0
    %589 = vmatpush2.bf16.msra.mxu0 0
    %590 = vmatprep.subr.bf16.mxu0 0
    %591 = vmatpush2.bf16.msra.mxu0 0
    %592 = vmatprep.subr.bf16.mxu0 0
    %593 = vmatpush2.bf16.msra.mxu0 0
    %594 = vmatprep.subr.bf16.mxu0 0
    %595 = vmatpush2.bf16.msra.mxu0 0
    %596 = vmatprep.subr.bf16.mxu0 0
    %597 = vmatpush2.bf16.msra.mxu0 0
    %598 = vmatprep.subr.bf16.mxu0 0
    %599 = vmatpush2.bf16.msra.mxu0 0
    %600 = vmatprep.subr.bf16.mxu0 0
    %601 = vmatpush2.bf16.msra.mxu0 0
    %602 = vmatprep.subr.bf16.mxu0 0
    %603 = vmatpush2.bf16.msra.mxu0 0
    %604 = vmatprep.mubr.bf16.mxu0 0
    %605 = vmatmul.mubr.bf16.gmra.mxu0 %v500
    %v606 = vpop.f32.mrf.mxu0
    %v607 = vadd.f32 %v523, %v606
    %v608 = vpop.f32.mrf.mxu0
    %v609 = vpop.f32.mrf.mxu0
    %v610 = vadd.f32 %v523, %v609
    %v611 = vpop.f32.mrf.mxu0
    %612 = vdwg.mxu0
    %v613 = vmul.f32 %v607, 0.809017
    %v614 = vmul.f32 %v610, 0.809017
    %v615 = vtanh.pop %v613
    %v616 = vtanh.pop %v614
    %v617 = vmul.f32 %v615, 0.809017
    %v618 = vmul.f32 %v616, 0.809017
    %v619 = vadd.f32 %v617, 0.809017
    %v620 = vadd.f32 %v618, 0.809017
    %v621 = vmul.f32 %v607, 0.618034
    %v622 = vmul.f32 %v610, 0.618034
    %v623 = vtanh.pop %v621
    %v624 = vtanh.pop %v622
    %v625 = vmul.f32 %v623, 0.5
    %v626 = vmul.f32 %v624, 0.5
    %v627 = vadd.f32 %v619, %v625
    %v628 = vadd.f32 %v620, %v626
    %v629 = vmul.f32 %v607, 1.1557274
    %v630 = vmul.f32 %v610, 1.1557274
    %v631 = vand.u32 2147483647, %v629
    %vm632 = vcmp.le.f32.partialorder %v631, 0.7853982
    %vm633 = vcmp.lt.s32.totalorder %v629, 0
    %v634 = vand.u32 %v629, 2139095040
    %v635 = vshrl.u32 %v634, 23
    %v636 = vsub.s32 %v635, 127
    %v637 = vand.u32 2147483647, %v629
    %v638 = vand.u32 %v637, 8388607
    %v639 = vor.u32 %v638, 8388608
    %v640 = vsub.s32 0, %v639
    %v641 = vadd.s32 %v636, 1
    %vm642 = vcmp.gt.s32.totalorder %v641, 0
    %v643 = vsel %vm642, %v641, 0
    %v644 = vshrl.u32 %v643, 5
    %v645 = vand.u32 %v643, 31
    %v646 = vsub.s32 32, %v645
    %v647 = vshrl.u32 683565275, %v646
    %v648 = vshll.u32 683565275, %v645
    %v649 = vshrl.u32 2475754826, %v646
    %v650 = vor.u32 %v648, %v649
    %v651 = vshll.u32 2475754826, %v645
    %v652 = vshrl.u32 2131351028, %v646
    %v653 = vor.u32 %v651, %v652
    %v654 = vshll.u32 2131351028, %v645
    %v655 = vshrl.u32 2102212464, %v646
    %v656 = vor.u32 %v654, %v655
    %v657 = vshll.u32 2102212464, %v645
    %v658 = vshrl.u32 920167782, %v646
    %v659 = vor.u32 %v657, %v658
    %v660 = vshll.u32 920167782, %v645
    %v661 = vshrl.u32 1326507024, %v646
    %v662 = vor.u32 %v660, %v661
    %vm663 = vcmp.lt.s32.totalorder %v644, 1
    %vm664 = vcmp.lt.s32.totalorder %v644, 2
    %vm665 = vcmp.lt.s32.totalorder %v644, 3
    %vm666 = vcmp.lt.s32.totalorder %v644, 4
    %v667 = vsel %vm663, %v647, %v650
    %v668 = vsel %vm666, %v656, 2102212464
    %v669 = vsel %vm665, %v653, %v668
    %v670 = vsel %vm664, %v667, %v669
    %v671 = vsel %vm663, %v650, %v653
    %v672 = vsel %vm666, %v659, 920167782
    %v673 = vsel %vm665, %v656, %v672
    %v674 = vsel %vm664, %v671, %v673
    %v675 = vsel %vm663, %v653, %v656
    %v676 = vsel %vm666, %v662, 1326507024
    %v677 = vsel %vm665, %v659, %v676
    %v678 = vsel %vm664, %v675, %v677
    %v679 = vshll.u32 %v639, 8
    %v680 = vmul.u32.u64.compose %v679, %v678
    %v681 = vextract.low.u32 %v680
    %v682 = vextract.high.u32 %v680
    %v683 = vmul.u32.u64.compose %v679, %v674
    %v684 = vextract.low.u32 %v683
    %v685 = vextract.high.u32 %v683
    %v686 = vmul.u32 %v679, %v670
    %v687 = vadd.s32 %v682, %v684
    %vm688 = vc.u32 %v682, %v684
    %v689 = vadd.s32 %v685, 1
    %v690 = vsel %vm688, %v689, %v685
    %v691 = vadd.s32 %v686, %v690
    %v692 = vadd.s32 %v691, 536870912
    %v693 = vshrl.u32 %v692, 30
    %v694 = vshll.u32 %v693, 30
    %v695 = vsub.s32 %v691, %v694
    %vm696 = vcmp.lt.s32.totalorder %v695, 0
    %v697 = vsub.s32 0, %v695
    %v698 = vsel %vm696, %v697, %v695
    %v699 = vclz %v698
    %v700 = vsub.s32 %v699, 2
    %vm701 = vcmp.gt.s32.totalorder 0, %v700
    %v702 = vsel %vm701, 0, %v700
    %v703 = vsub.s32 32, %v702
    %v704 = vshll.u32 %v695, %v702
    %v705 = vshrl.u32 %v687, %v703
    %v706 = vor.u32 %v704, %v705
    %v707 = vsub.s32 4294967266, %v702
    %v708 = vadd.s32 %v707, 127
    %v709 = vshll.u32 %v708, 23
    %v710 = vor.u32 4788187, %v709
    %v711 = vand.u32 2147483647, %v710
    %v713 = vcvt.s32.f32 %v706
    %v714 = vmul.f32 %v713, %v711
    %v715 = vxor.u32 %v714, 2147483648
    %v716 = vsel %vm633, %v715, %v714
    %v717 = vsub.s32 4, %v693
    %v718 = vsel %vm633, %v717, %v693
    %v719 = vsel %vm632, %v629, %v716
    %v720 = vsel %vm632, 0, %v718
    %v721 = vcosq.f32.pop %v719
    %v722 = vsinq.f32.pop %v719
    %vm723 = vweird.f32 %v629
    %v724 = vadd.s32 %v720, 3
    %v725 = vand.u32 %v724, 3
    %vm726 = vcmp.lt.s32.totalorder %v725, 2
    %vm727 = vcmp.eq.s32.totalorder %v725, 0
    %v728 = vxor.u32 %v722, 2147483648
    %v729 = vsel %vm727, %v721, %v728
    %vm730 = vcmp.eq.s32.totalorder %v725, 2
    %v731 = vxor.u32 %v721, 2147483648
    %v732 = vsel %vm730, %v731, %v722
    %v733 = vsel %vm726, %v729, %v732
    %v734 = vsel %vm723, nan, %v733
    %v735 = vand.u32 2147483647, %v630
    %vm736 = vcmp.le.f32.partialorder %v735, 0.7853982
    %vm737 = vcmp.lt.s32.totalorder %v630, 0
    %v738 = vand.u32 %v630, 2139095040
    %v739 = vshrl.u32 %v738, 23
    %v740 = vsub.s32 %v739, 127
    %v741 = vand.u32 2147483647, %v630
    %v742 = vand.u32 %v741, 8388607
    %v743 = vor.u32 %v742, 8388608
    %v744 = vsub.s32 0, %v743
    %v745 = vadd.s32 %v740, 1
    %vm746 = vcmp.gt.s32.totalorder %v745, 0
    %v747 = vsel %vm746, %v745, 0
    %v748 = vshrl.u32 %v747, 5
    %v749 = vand.u32 %v747, 31
    %v750 = vsub.s32 32, %v749
    %v751 = vshrl.u32 683565275, %v750
    %v752 = vshll.u32 683565275, %v749
    %v753 = vshrl.u32 2475754826, %v750
    %v754 = vor.u32 %v752, %v753
    %v755 = vshll.u32 2475754826, %v749
    %v756 = vshrl.u32 2131351028, %v750
    %v757 = vor.u32 %v755, %v756
    %v758 = vshll.u32 2131351028, %v749
    %v759 = vshrl.u32 2102212464, %v750
    %v760 = vor.u32 %v758, %v759
    %v761 = vshll.u32 2102212464, %v749
    %v762 = vshrl.u32 920167782, %v750
    %v763 = vor.u32 %v761, %v762
    %v764 = vshll.u32 920167782, %v749
    %v765 = vshrl.u32 1326507024, %v750
    %v766 = vor.u32 %v764, %v765
    %vm767 = vcmp.lt.s32.totalorder %v748, 1
    %vm768 = vcmp.lt.s32.totalorder %v748, 2
    %vm769 = vcmp.lt.s32.totalorder %v748, 3
    %vm770 = vcmp.lt.s32.totalorder %v748, 4
    %v771 = vsel %vm767, %v751, %v754
    %v772 = vsel %vm770, %v760, 2102212464
    %v773 = vsel %vm769, %v757, %v772
    %v774 = vsel %vm768, %v771, %v773
    %v775 = vsel %vm767, %v754, %v757
    %v776 = vsel %vm770, %v763, 920167782
    %v777 = vsel %vm769, %v760, %v776
    %v778 = vsel %vm768, %v775, %v777
    %v779 = vsel %vm767, %v757, %v760
    %v780 = vsel %vm770, %v766, 1326507024
    %v781 = vsel %vm769, %v763, %v780
    %v782 = vsel %vm768, %v779, %v781
    %v783 = vshll.u32 %v743, 8
    %v784 = vmul.u32.u64.compose %v783, %v782
    %v785 = vextract.low.u32 %v784
    %v786 = vextract.high.u32 %v784
    %v787 = vmul.u32.u64.compose %v783, %v778
    %v788 = vextract.low.u32 %v787
    %v789 = vextract.high.u32 %v787
    %v790 = vmul.u32 %v783, %v774
    %v791 = vadd.s32 %v786, %v788
    %vm792 = vc.u32 %v786, %v788
    %v793 = vadd.s32 %v789, 1
    %v794 = vsel %vm792, %v793, %v789
    %v795 = vadd.s32 %v790, %v794
    %v796 = vadd.s32 %v795, 536870912
    %v797 = vshrl.u32 %v796, 30
    %v798 = vshll.u32 %v797, 30
    %v799 = vsub.s32 %v795, %v798
    %vm800 = vcmp.lt.s32.totalorder %v799, 0
    %v801 = vsub.s32 0, %v799
    %v802 = vsel %vm800, %v801, %v799
    %v803 = vclz %v802
    %v804 = vsub.s32 %v803, 2
    %vm805 = vcmp.gt.s32.totalorder 0, %v804
    %v806 = vsel %vm805, 0, %v804
    %v807 = vsub.s32 32, %v806
    %v808 = vshll.u32 %v799, %v806
    %v809 = vshrl.u32 %v791, %v807
    %v810 = vor.u32 %v808, %v809
    %v811 = vsub.s32 4294967266, %v806
    %v812 = vadd.s32 %v811, 127
    %v813 = vshll.u32 %v812, 23
    %v814 = vor.u32 4788187, %v813
    %v815 = vand.u32 2147483647, %v814
    %v817 = vcvt.s32.f32 %v810
    %v818 = vmul.f32 %v817, %v815
    %v819 = vxor.u32 %v818, 2147483648
    %v820 = vsel %vm737, %v819, %v818
    %v821 = vsub.s32 4, %v797
    %v822 = vsel %vm737, %v821, %v797
    %v823 = vsel %vm736, %v630, %v820
    %v824 = vsel %vm736, 0, %v822
    %v825 = vcosq.f32.pop %v823
    %v826 = vsinq.f32.pop %v823
    %vm827 = vweird.f32 %v630
    %v828 = vadd.s32 %v824, 3
    %v829 = vand.u32 %v828, 3
    %vm830 = vcmp.lt.s32.totalorder %v829, 2
    %vm831 = vcmp.eq.s32.totalorder %v829, 0
    %v832 = vxor.u32 %v826, 2147483648
    %v833 = vsel %vm831, %v825, %v832
    %vm834 = vcmp.eq.s32.totalorder %v829, 2
    %v835 = vxor.u32 %v825, 2147483648
    %v836 = vsel %vm834, %v835, %v826
    %v837 = vsel %vm830, %v833, %v836
    %v838 = vsel %vm827, nan, %v837
    %v839 = vmul.f32 %v734, 0.5
    %v840 = vmul.f32 %v838, 0.5
    %v841 = vadd.f32 %v627, %v839
    %v842 = vadd.f32 %v628, %v840
    %v843 = vmul.f32 %v841, 0.38196602
    %v844 = vmul.f32 %v842, 0.38196602
    %845 = vadd.xlane.f32.xlu0 %v843
    %v846 = vpop.xlane.xlu0 %845
    %847 = vadd.xlane.f32.xlu0 %v844
    %v848 = vpop.xlane.xlu0 %847
    %v849 = vsub.f32 %v846, 33.682854
    %v850 = vsub.f32 %v848, 33.682854
    %v851 = vmul.f32 %v849, 0.05263158
    %v852 = vmul.f32 %v850, 0.05263158
    %v853 = vsub.f32 %v843, %v851
    %v854 = vsub.f32 %v844, %v852
    %v855 = vsub.f32 0.309017, %v851
    %v856 = vsub.f32 0.309017, %v852
    %v857 = vmul.f32 %v853, %v853
    %v858 = vmul.f32 %v854, %v854
    %859 = vadd.xlane.f32.xlu0 %v857
    %v860 = vpop.xlane.xlu0 %859
    %861 = vadd.xlane.f32.xlu0 %v858
    %v862 = vpop.xlane.xlu0 %861
    %v863 = vmul.f32 %v855, 109.0
    %v864 = vmul.f32 %v856, 109.0
    %v865 = vmul.f32 %v863, %v855
    %v866 = vmul.f32 %v864, %v856
    %v867 = vsub.f32 %v860, %v865
    %v868 = vsub.f32 %v862, %v866
    %v869 = vmul.f32 %v867, 0.05263158
    %v870 = vmul.f32 %v868, 0.05263158
    %v871 = vadd.f32 %v869, 1e-05
    %v872 = vadd.f32 %v870, 1e-05
    %v873 = vrsqrt.pop %v871
    %v874 = vrsqrt.pop %v872
    %v875 = vmul.f32 %v853, %v873
    %v876 = vmul.f32 %v854, %v874
    %v877 = vlaneseq
    %v878 = vshrl.u32 %v877, 7
    %v879 = vsub.s32 0, %v878
    %v880 = vrot.slane %v502, %v879
    %v881 = vmul.f32 %v875, %v880
    %v882 = vmul.f32 %v876, %v880
    %v883 = vlaneseq
    %v884 = vshrl.u32 %v883, 7
    %v885 = vsub.s32 0, %v884
    %v886 = vrot.slane %v503, %v885
    %v887 = vadd.f32 %v881, %v886
    %v888 = vadd.f32 %v882, %v886
    %v889 = vpack.c.bf16 %v888, %v887
    %v890 = vld [vmem:[#allocation9] sm:$0xf]
    %v891 = vld [vmem:[#allocation9 + $0x4] sm:$0xf]
    %v892 = vld [vmem:[#allocation9 + $0x8] sm:$0xf]
    %v893 = vld [vmem:[#allocation9 + $0xc] sm:$0xf]
    %v894 = vld [vmem:[#allocation9 + $0x10] sm:$0xf]
    %v895 = vld [vmem:[#allocation9 + $0x14] sm:$0xf]
    %v896 = vld [vmem:[#allocation9 + $0x18] sm:$0xf]
    %v897 = vld [vmem:[#allocation9 + $0x1c] sm:$0xf]
    %v898 = vld [vmem:[#allocation9 + $0x20] sm:$0xf]
    %v899 = vld [vmem:[#allocation9 + $0x24] sm:$0xf]
    %v900 = vld [vmem:[#allocation9 + $0x28] sm:$0xf]
    %v901 = vld [vmem:[#allocation9 + $0x2c] sm:$0xf]
    %v902 = vld [vmem:[#allocation9 + $0x30] sm:$0xf]
    %v903 = vld [vmem:[#allocation9 + $0x34] sm:$0xf]
    %v904 = vld [vmem:[#allocation9 + $0x38] sm:$0xf]
    %v905 = vld [vmem:[#allocation9 + $0x3c] sm:$0xf]
    %v906 = vld [vmem:[%s8] sm:$0x1]
    %v907 = vlaneseq
    %v908 = vshrl.u32 %v907, 7
    %v909 = vsub.s32 0, %v908
    %v910 = vrot.slane %v906, %v909
    %v927 = vunpack.c.l.b16 %v890
    %v928 = vunpack.c.l.b16 %v891
    %v929 = vunpack.c.l.b16 %v892
    %v930 = vunpack.c.l.b16 %v893
    %v931 = vunpack.c.l.b16 %v894
    %v932 = vunpack.c.l.b16 %v895
    %v933 = vunpack.c.l.b16 %v896
    %v934 = vunpack.c.l.b16 %v897
    %v935 = vunpack.c.l.b16 %v898
    %v936 = vunpack.c.l.b16 %v899
    %v937 = vunpack.c.l.b16 %v900
    %v938 = vunpack.c.l.b16 %v901
    %v939 = vunpack.c.l.b16 %v902
    %v940 = vunpack.c.l.b16 %v903
    %v941 = vunpack.c.l.b16 %v904
    %v942 = vunpack.c.l.b16 %v905
    %v943 = vpack.c.b16 %v928, %v927
    %v944 = vpack.c.b16 %v930, %v929
    %v945 = vpack.c.b16 %v932, %v931
    %v946 = vpack.c.b16 %v934, %v933
    %v947 = vpack.c.b16 %v936, %v935
    %v948 = vpack.c.b16 %v938, %v937
    %v949 = vpack.c.b16 %v940, %v939
    %v950 = vpack.c.b16 %v942, %v941
    %959 = vmatprep.subr.bf16.mxu0 0
    %960 = vmatpush1.bf16.msra.mxu0 %v950
    %961 = vmatprep.subr.bf16.mxu0 0
    %962 = vmatpush1.bf16.msra.mxu0 %v949
    %963 = vmatprep.subr.bf16.mxu0 0
    %964 = vmatpush1.bf16.msra.mxu0 %v948
    %965 = vmatprep.subr.bf16.mxu0 0
    %966 = vmatpush1.bf16.msra.mxu0 %v947
    %967 = vmatprep.subr.bf16.mxu0 0
    %968 = vmatpush1.bf16.msra.mxu0 %v946
    %969 = vmatprep.subr.bf16.mxu0 0
    %970 = vmatpush1.bf16.msra.mxu0 %v945
    %971 = vmatprep.subr.bf16.mxu0 0
    %972 = vmatpush1.bf16.msra.mxu0 %v944
    %973 = vmatprep.subr.bf16.mxu0 0
    %974 = vmatpush1.bf16.msra.mxu0 %v943
    %975 = vmatprep.subr.bf16.mxu0 0
    %976 = vmatpush2.bf16.msra.mxu0 0
    %977 = vmatprep.subr.bf16.mxu0 0
    %978 = vmatpush2.bf16.msra.mxu0 0
    %979 = vmatprep.subr.bf16.mxu0 0
    %980 = vmatpush2.bf16.msra.mxu0 0
    %981 = vmatprep.subr.bf16.mxu0 0
    %982 = vmatpush2.bf16.msra.mxu0 0
    %983 = vmatprep.subr.bf16.mxu0 0
    %984 = vmatpush2.bf16.msra.mxu0 0
    %985 = vmatprep.subr.bf16.mxu0 0
    %986 = vmatpush2.bf16.msra.mxu0 0
    %987 = vmatprep.subr.bf16.mxu0 0
    %988 = vmatpush2.bf16.msra.mxu0 0
    %989 = vmatprep.subr.bf16.mxu0 0
    %990 = vmatpush2.bf16.msra.mxu0 0
    %991 = vmatprep.mubr.bf16.mxu0 0
    %992 = vmatmul.mubr.bf16.gmra.mxu0 %v889
    %v993 = vpop.f32.mrf.mxu0
    %v994 = vadd.f32 %v910, %v993
    %v995 = vpop.f32.mrf.mxu0
    %v996 = vpop.f32.mrf.mxu0
    %v997 = vadd.f32 %v910, %v996
    %v998 = vpop.f32.mrf.mxu0
    %999 = vdwg.mxu0
    %v1000 = vpack.c.bf16 %v997, %v994
    %v1001 = vld [vmem:[#allocation11] sm:$0xf]
    %v1002 = vld [vmem:[#allocation11 + $0x4] sm:$0xf]
    %v1003 = vld [vmem:[#allocation11 + $0x8] sm:$0xf]
    %v1004 = vld [vmem:[#allocation11 + $0xc] sm:$0xf]
    %v1005 = vld [vmem:[#allocation11 + $0x10] sm:$0xf]
    %v1006 = vld [vmem:[#allocation11 + $0x14] sm:$0xf]
    %v1007 = vld [vmem:[#allocation11 + $0x18] sm:$0xf]
    %v1008 = vld [vmem:[#allocation11 + $0x1c] sm:$0xf]
    %v1009 = vld [vmem:[#allocation11 + $0x20] sm:$0xf]
    %v1010 = vld [vmem:[#allocation11 + $0x24] sm:$0xf]
    %v1011 = vld [vmem:[#allocation11 + $0x28] sm:$0xf]
    %v1012 = vld [vmem:[#allocation11 + $0x2c] sm:$0xf]
    %v1013 = vld [vmem:[#allocation11 + $0x30] sm:$0xf]
    %v1014 = vld [vmem:[#allocation11 + $0x34] sm:$0xf]
    %v1015 = vld [vmem:[#allocation11 + $0x38] sm:$0xf]
    %v1016 = vld [vmem:[#allocation11 + $0x3c] sm:$0xf]
    %v1017 = vld [vmem:[%s8 + $0x1] sm:$0x1]
    %v1018 = vlaneseq
    %v1019 = vshrl.u32 %v1018, 7
    %v1020 = vsub.s32 0, %v1019
    %v1021 = vrot.slane %v1017, %v1020
    %v1038 = vunpack.c.l.b16 %v1001
    %v1039 = vunpack.c.l.b16 %v1002
    %v1040 = vunpack.c.l.b16 %v1003
    %v1041 = vunpack.c.l.b16 %v1004
    %v1042 = vunpack.c.l.b16 %v1005
    %v1043 = vunpack.c.l.b16 %v1006
    %v1044 = vunpack.c.l.b16 %v1007
    %v1045 = vunpack.c.l.b16 %v1008
    %v1046 = vunpack.c.l.b16 %v1009
    %v1047 = vunpack.c.l.b16 %v1010
    %v1048 = vunpack.c.l.b16 %v1011
    %v1049 = vunpack.c.l.b16 %v1012
    %v1050 = vunpack.c.l.b16 %v1013
    %v1051 = vunpack.c.l.b16 %v1014
    %v1052 = vunpack.c.l.b16 %v1015
    %v1053 = vunpack.c.l.b16 %v1016
    %v1054 = vpack.c.b16 %v1039, %v1038
    %v1055 = vpack.c.b16 %v1041, %v1040
    %v1056 = vpack.c.b16 %v1043, %v1042
    %v1057 = vpack.c.b16 %v1045, %v1044
    %v1058 = vpack.c.b16 %v1047, %v1046
    %v1059 = vpack.c.b16 %v1049, %v1048
    %v1060 = vpack.c.b16 %v1051, %v1050
    %v1061 = vpack.c.b16 %v1053, %v1052
    %1070 = vmatprep.subr.bf16.mxu0 0
    %1071 = vmatpush1.bf16.msra.mxu0 %v1061
    %1072 = vmatprep.subr.bf16.mxu0 0
    %1073 = vmatpush1.bf16.msra.mxu0 %v1060
    %1074 = vmatprep.subr.bf16.mxu0 0
    %1075 = vmatpush1.bf16.msra.mxu0 %v1059
    %1076 = vmatprep.subr.bf16.mxu0 0
    %1077 = vmatpush1.bf16.msra.mxu0 %v1058
    %1078 = vmatprep.subr.bf16.mxu0 0
    %1079 = vmatpush1.bf16.msra.mxu0 %v1057
    %1080 = vmatprep.subr.bf16.mxu0 0
    %1081 = vmatpush1.bf16.msra.mxu0 %v1056
    %1082 = vmatprep.subr.bf16.mxu0 0
    %1083 = vmatpush1.bf16.msra.mxu0 %v1055
    %1084 = vmatprep.subr.bf16.mxu0 0
    %1085 = vmatpush1.bf16.msra.mxu0 %v1054
    %1086 = vmatprep.subr.bf16.mxu0 0
    %1087 = vmatpush2.bf16.msra.mxu0 0
    %1088 = vmatprep.subr.bf16.mxu0 0
    %1089 = vmatpush2.bf16.msra.mxu0 0
    %1090 = vmatprep.subr.bf16.mxu0 0
    %1091 = vmatpush2.bf16.msra.mxu0 0
    %1092 = vmatprep.subr.bf16.mxu0 0
    %1093 = vmatpush2.bf16.msra.mxu0 0
    %1094 = vmatprep.subr.bf16.mxu0 0
    %1095 = vmatpush2.bf16.msra.mxu0 0
    %1096 = vmatprep.subr.bf16.mxu0 0
    %1097 = vmatpush2.bf16.msra.mxu0 0
    %1098 = vmatprep.subr.bf16.mxu0 0
    %1099 = vmatpush2.bf16.msra.mxu0 0
    %1100 = vmatprep.subr.bf16.mxu0 0
    %1101 = vmatpush2.bf16.msra.mxu0 0
    %1102 = vmatprep.mubr.bf16.mxu0 0
    %1103 = vmatmul.mubr.bf16.gmra.mxu0 %v1000
    %v1104 = vpop.f32.mrf.mxu0
    %v1105 = vadd.f32 %v1021, %v1104
    %v1106 = vpop.f32.mrf.mxu0
    %v1107 = vpop.f32.mrf.mxu0
    %v1108 = vadd.f32 %v1021, %v1107
    %v1109 = vpop.f32.mrf.mxu0
    %1110 = vdwg.mxu0
    %1111 = vst [vmem:[#allocation12] sm:$0xff] %v1105
    %1112 = vst [vmem:[#allocation12 + $0x8] sm:$0xff] %v1108
    // Predicated region
    $region58: #{tpu_custom_call.1} parent=1 // pred_check
      _
    $region59: #{tpu_custom_call.1} parent=1 // pred_check_branch
      %1114 = sbr.rel (0) target = $region61
    $region60: #{tpu_custom_call.1} parent=1 // pred_region
      %s1116 = ssub.s32 256, 256
      %1117 = vsyncadd [#allocation5], %s1116
      %s1118 = sshll.u32 [#allocation12], 4
      %s1119 = int_to_ptr.vmem [resolvable:$true] %s1118
      %1124 = dma.vmem_to_hbm [thread:$0]  %s1119, 256, %s9, [#allocation5], 128, 128, 8
    $region61: #{tpu_custom_call.1} parent=1 // pred_fallthru
      _
    // Predicated region
    $region62: #{tpu_custom_call.1} parent=1 // pred_check
      _
    $region63: #{tpu_custom_call.1} parent=1 // pred_check_branch
      %1126 = sbr.rel (0) target = $region65
    $region64: #{tpu_custom_call.1} parent=1 // pred_region
      %1127 = dma.done [#allocation5], 256
    $region65: #{tpu_custom_call.1} parent=1 // pred_fallthru
      _
    %1128 = vsyncpa [#allocation4], 1
    %1129 = vsyncpa [#allocation7], 1
    %1130 = vsyncpa [#allocation10], 1
    %1131 = vsyncpa [#allocation5], 1

// kernel: tpu_custom_call.1
$region0: #{tpu_custom_call.1}
  #allocation0 [shape = 'u32[]', space=smem, size = 0x4, offset = 0x4, fixed_abs, tag = 'smem constant byte address 0x4 - core index']
  #allocation1 [shape = 'u32[144,128]{1,0:T(1,128)}', space=vmem, size = 0x12000, scoped, tag = 'internal scratch']
  #allocation2 [shape = 'f32[1]{0:T(128)S(6)}', space=smem, size = 0x200, scoped, tag = 'scoped memory for tpu_custom_call.1']
  %s0 = inlined_call_operand.<no memory space> [shape: f32[1], index: 0, kind: input, shape index: {}]
  %s1 = inlined_call_operand.hbm [shape: bf16[16,128], index: 1, kind: input, shape index: {}]
  %s2 = inlined_call_operand.hbm [shape: bf16[128,128], index: 2, kind: input, shape index: {}]
  %s3 = inlined_call_operand.vmem [shape: f32[3,128], index: 3, kind: input, shape index: {}]
  %s4 = inlined_call_operand.hbm [shape: bf16[128,128], index: 4, kind: input, shape index: {}]
  %s5 = inlined_call_operand.vmem [shape: f32[3,128], index: 5, kind: input, shape index: {}]
  %s6 = inlined_call_operand.hbm [shape: bf16[128,128], index: 6, kind: input, shape index: {}]
  %s7 = inlined_call_operand.hbm [shape: bf16[128,128], index: 7, kind: input, shape index: {}]
  %s8 = inlined_call_operand.vmem [shape: f32[2,128], index: 8, kind: input, shape index: {}]
  %s9 = inlined_call_operand.hbm [shape: f32[16,128], index: 9, kind: output, shape index: {}]
  %s10 = sld [smem:[#allocation0]]
  $region66: #{tpu_custom_call.1} parent=0
    _
  %s12 = ssub.s32 1, %s10
  %s13 = scalar_select 0, %s12, %s10
  %14 = sst [smem:[#allocation2]] %s0
  $region1: #{tpu_custom_call.1} parent=0
    #allocation3 [shape = 'u8[4096]{0}', space=vmem, size = 0x1000, scoped, tag = 'input window, operand 1, single buffered']
    #allocation4 [shape = 's32[1]{0}', space=sflag, size = 0x4, scoped, tag = 'scoped memory for tpu_custom_call.1']
    #allocation5 [shape = 's32[1]{0}', space=sflag, size = 0x4, scoped, tag = 'scoped memory for tpu_custom_call.1']
    #allocation6 [shape = 'u8[32768]{0}', space=vmem, size = 0x8000, scoped, tag = 'input window, operand 2, single buffered']
    #allocation7 [shape = 's32[1]{0}', space=sflag, size = 0x4, scoped, tag = 'scoped memory for tpu_custom_call.1']
    #allocation8 [shape = 'u8[32768]{0}', space=vmem, size = 0x8000, scoped, tag = 'input window, operand 4, single buffered']
    #allocation9 [shape = 'u8[32768]{0}', space=vmem, size = 0x8000, scoped, tag = 'input window, operand 6, single buffered']
    #allocation10 [shape = 's32[1]{0}', space=sflag, size = 0x4, scoped, tag = 'scoped memory for tpu_custom_call.1']
    #allocation11 [shape = 'u8[32768]{0}', space=vmem, size = 0x8000, scoped, tag = 'input window, operand 7, single buffered']
    #allocation12 [shape = 'u8[8192]{0}', space=vmem, size = 0x2000, scoped, tag = 'output window, operand 0, single buffered']
    %15 = vsyncpa [#allocation4], 0
    %16 = vsyncpa [#allocation7], 0
    %17 = vsyncpa [#allocation10], 0
    %18 = vsyncpa [#allocation5], 0
    // Predicated region
    $region2: #{tpu_custom_call.1} parent=1 // pred_check
      _
    $region3: #{tpu_custom_call.1} parent=1 // pred_check_branch
      %20 = sbr.rel (0) target = $region5
    $region4: #{tpu_custom_call.1} parent=1 // pred_region
      _
    $region5: #{tpu_custom_call.1} parent=1 // pred_fallthru
      _
    // Predicated region
    $region6: #{tpu_custom_call.1} parent=1 // pred_check
      _
    $region7: #{tpu_custom_call.1} parent=1 // pred_check_branch
      %22 = sbr.rel (0) target = $region9
    $region8: #{tpu_custom_call.1} parent=1 // pred_region
      %s24 = ssub.s32 128, 128
      %25 = vsyncadd [#allocation4], %s24
      %s26 = sshll.u32 [#allocation3], 4
      %s27 = int_to_ptr.vmem [resolvable:$true] %s26
      %32 = dma.hbm_to_vmem [thread:$0]  %s1, 128, %s27, [#allocation4], 64, 64, 4
    $region9: #{tpu_custom_call.1} parent=1 // pred_fallthru
      _
    // Predicated region
    $region10: #{tpu_custom_call.1} parent=1 // pred_check
      _
    $region11: #{tpu_custom_call.1} parent=1 // pred_check_branch
      %34 = sbr.rel (0) target = $region13
    $region12: #{tpu_custom_call.1} parent=1 // pred_region
      %s36 = ssub.s32 1024, 1024
      %37 = vsyncadd [#allocation7], %s36
      %s38 = sshll.u32 [#allocation6], 4
      %s39 = int_to_ptr.vmem [resolvable:$true] %s38
      %44 = dma.hbm_to_vmem [thread:$0]  %s2, 1024, %s39, [#allocation7], 64, 64, 4
    $region13: #{tpu_custom_call.1} parent=1 // pred_fallthru
      _
    // Predicated region
    $region14: #{tpu_custom_call.1} parent=1 // pred_check
      _
    $region15: #{tpu_custom_call.1} parent=1 // pred_check_branch
      %46 = sbr.rel (0) target = $region17
    $region16: #{tpu_custom_call.1} parent=1 // pred_region
      _
    $region17: #{tpu_custom_call.1} parent=1 // pred_fallthru
      _
    // Predicated region
    $region18: #{tpu_custom_call.1} parent=1 // pred_check
      _
    $region19: #{tpu_custom_call.1} parent=1 // pred_check_branch
      %48 = sbr.rel (0) target = $region21
    $region20: #{tpu_custom_call.1} parent=1 // pred_region
      %s50 = ssub.s32 1024, 1024
      %51 = vsyncadd [#allocation7], %s50
      %s52 = sshll.u32 [#allocation8], 4
      %s53 = int_to_ptr.vmem [resolvable:$true] %s52
      %58 = dma.hbm_to_vmem [thread:$0]  %s4, 1024, %s53, [#allocation7], 64, 64, 4
    $region21: #{tpu_custom_call.1} parent=1 // pred_fallthru
      _
    // Predicated region
    $region22: #{tpu_custom_call.1} parent=1 // pred_check
      _
    $region23: #{tpu_custom_call.1} parent=1 // pred_check_branch
      %60 = sbr.rel (0) target = $region25
    $region24: #{tpu_custom_call.1} parent=1 // pred_region
      _
    $region25: #{tpu_custom_call.1} parent=1 // pred_fallthru
      _
    // Predicated region
    $region26: #{tpu_custom_call.1} parent=1 // pred_check
      _
    $region27: #{tpu_custom_call.1} parent=1 // pred_check_branch
      %62 = sbr.rel (0) target = $region29
    $region28: #{tpu_custom_call.1} parent=1 // pred_region
      %s64 = ssub.s32 1024, 1024
      %65 = vsyncadd [#allocation10], %s64
      %s66 = sshll.u32 [#allocation9], 4
      %s67 = int_to_ptr.vmem [resolvable:$true] %s66
      %72 = dma.hbm_to_vmem [thread:$0]  %s6, 1024, %s67, [#allocation10], 64, 64, 4
    $region29: #{tpu_custom_call.1} parent=1 // pred_fallthru
      _
    // Predicated region
    $region30: #{tpu_custom_call.1} parent=1 // pred_check
      _
    $region31: #{tpu_custom_call.1} parent=1 // pred_check_branch
      %74 = sbr.rel (0) target = $region33
    $region32: #{tpu_custom_call.1} parent=1 // pred_region
      %s76 = ssub.s32 1024, 1024
      %77 = vsyncadd [#allocation10], %s76
      %s78 = sshll.u32 [#allocation11], 4
      %s79 = int_to_ptr.vmem [resolvable:$true] %s78
      %84 = dma.hbm_to_vmem [thread:$0]  %s7, 1024, %s79, [#allocation10], 64, 64, 4
    $region33: #{tpu_custom_call.1} parent=1 // pred_fallthru
      _
    // Predicated region
    $region34: #{tpu_custom_call.1} parent=1 // pred_check
      _
    $region35: #{tpu_custom_call.1} parent=1 // pred_check_branch
      %86 = sbr.rel (0) target = $region37
    $region36: #{tpu_custom_call.1} parent=1 // pred_region
      _
    $region37: #{tpu_custom_call.1} parent=1 // pred_fallthru
      _
    // Predicated region
    $region38: #{tpu_custom_call.1} parent=1 // pred_check
      _
    $region39: #{tpu_custom_call.1} parent=1 // pred_check_branch
      %88 = sbr.rel (0) target = $region41
    $region40: #{tpu_custom_call.1} parent=1 // pred_region
      %89 = dma.done [#allocation4], 128
    $region41: #{tpu_custom_call.1} parent=1 // pred_fallthru
      _
    // Predicated region
    $region42: #{tpu_custom_call.1} parent=1 // pred_check
      _
    $region43: #{tpu_custom_call.1} parent=1 // pred_check_branch
      %91 = sbr.rel (0) target = $region45
    $region44: #{tpu_custom_call.1} parent=1 // pred_region
      %92 = dma.done [#allocation7], 1024
    $region45: #{tpu_custom_call.1} parent=1 // pred_fallthru
      _
    // Predicated region
    $region46: #{tpu_custom_call.1} parent=1 // pred_check
      _
    $region47: #{tpu_custom_call.1} parent=1 // pred_check_branch
      %94 = sbr.rel (0) target = $region49
    $region48: #{tpu_custom_call.1} parent=1 // pred_region
      %95 = dma.done [#allocation7], 1024
    $region49: #{tpu_custom_call.1} parent=1 // pred_fallthru
      _
    // Predicated region
    $region50: #{tpu_custom_call.1} parent=1 // pred_check
      _
    $region51: #{tpu_custom_call.1} parent=1 // pred_check_branch
      %97 = sbr.rel (0) target = $region53
    $region52: #{tpu_custom_call.1} parent=1 // pred_region
      %98 = dma.done [#allocation10], 1024
    $region53: #{tpu_custom_call.1} parent=1 // pred_fallthru
      _
    // Predicated region
    $region54: #{tpu_custom_call.1} parent=1 // pred_check
      _
    $region55: #{tpu_custom_call.1} parent=1 // pred_check_branch
      %100 = sbr.rel (0) target = $region57
    $region56: #{tpu_custom_call.1} parent=1 // pred_region
      %101 = dma.done [#allocation10], 1024
    $region57: #{tpu_custom_call.1} parent=1 // pred_fallthru
      _
    %v103 = vld [vmem:[#allocation3] sm:$0xf]
    %v104 = vld [vmem:[#allocation3 + $0x4] sm:$0xf]
    %v105 = vunpack.c.l.bf16 %v103
    %v106 = vunpack.c.l.bf16 %v104
    %s107 = sld [smem:[#allocation2]]
    %v108 = vstv %s107
    %v109 = vmul.f32 %v105, %v108
    %v110 = vmul.f32 %v106, %v108
    %v111 = vpack.c.bf16 %v110, %v109
    %v112 = vld [vmem:[%s3] sm:$0x1]
    %v113 = vld [vmem:[%s3 + $0x1] sm:$0x1]
    %v114 = vld [vmem:[%s3 + $0x2] sm:$0x1]
    %v115 = vld [vmem:[#allocation6] sm:$0xf]
    %v116 = vld [vmem:[#allocation6 + $0x4] sm:$0xf]
    %v117 = vld [vmem:[#allocation6 + $0x8] sm:$0xf]
    %v118 = vld [vmem:[#allocation6 + $0xc] sm:$0xf]
    %v119 = vld [vmem:[#allocation6 + $0x10] sm:$0xf]
    %v120 = vld [vmem:[#allocation6 + $0x14] sm:$0xf]
    %v121 = vld [vmem:[#allocation6 + $0x18] sm:$0xf]
    %v122 = vld [vmem:[#allocation6 + $0x1c] sm:$0xf]
    %v123 = vld [vmem:[#allocation6 + $0x20] sm:$0xf]
    %v124 = vld [vmem:[#allocation6 + $0x24] sm:$0xf]
    %v125 = vld [vmem:[#allocation6 + $0x28] sm:$0xf]
    %v126 = vld [vmem:[#allocation6 + $0x2c] sm:$0xf]
    %v127 = vld [vmem:[#allocation6 + $0x30] sm:$0xf]
    %v128 = vld [vmem:[#allocation6 + $0x34] sm:$0xf]
    %v129 = vld [vmem:[#allocation6 + $0x38] sm:$0xf]
    %v130 = vld [vmem:[#allocation6 + $0x3c] sm:$0xf]
    %v131 = vlaneseq
    %v132 = vshrl.u32 %v131, 7
    %v133 = vsub.s32 0, %v132
    %v134 = vrot.slane %v112, %v133
    %v151 = vunpack.c.l.b16 %v115
    %v152 = vunpack.c.l.b16 %v116
    %v153 = vunpack.c.l.b16 %v117
    %v154 = vunpack.c.l.b16 %v118
    %v155 = vunpack.c.l.b16 %v119
    %v156 = vunpack.c.l.b16 %v120
    %v157 = vunpack.c.l.b16 %v121
    %v158 = vunpack.c.l.b16 %v122
    %v159 = vunpack.c.l.b16 %v123
    %v160 = vunpack.c.l.b16 %v124
    %v161 = vunpack.c.l.b16 %v125
    %v162 = vunpack.c.l.b16 %v126
    %v163 = vunpack.c.l.b16 %v127
    %v164 = vunpack.c.l.b16 %v128
    %v165 = vunpack.c.l.b16 %v129
    %v166 = vunpack.c.l.b16 %v130
    %v167 = vpack.c.b16 %v152, %v151
    %v168 = vpack.c.b16 %v154, %v153
    %v169 = vpack.c.b16 %v156, %v155
    %v170 = vpack.c.b16 %v158, %v157
    %v171 = vpack.c.b16 %v160, %v159
    %v172 = vpack.c.b16 %v162, %v161
    %v173 = vpack.c.b16 %v164, %v163
    %v174 = vpack.c.b16 %v166, %v165
    %183 = vmatprep.subr.bf16.mxu0 0
    %184 = vmatpush1.bf16.msra.mxu0 %v174
    %185 = vmatprep.subr.bf16.mxu0 0
    %186 = vmatpush1.bf16.msra.mxu0 %v173
    %187 = vmatprep.subr.bf16.mxu0 0
    %188 = vmatpush1.bf16.msra.mxu0 %v172
    %189 = vmatprep.subr.bf16.mxu0 0
    %190 = vmatpush1.bf16.msra.mxu0 %v171
    %191 = vmatprep.subr.bf16.mxu0 0
    %192 = vmatpush1.bf16.msra.mxu0 %v170
    %193 = vmatprep.subr.bf16.mxu0 0
    %194 = vmatpush1.bf16.msra.mxu0 %v169
    %195 = vmatprep.subr.bf16.mxu0 0
    %196 = vmatpush1.bf16.msra.mxu0 %v168
    %197 = vmatprep.subr.bf16.mxu0 0
    %198 = vmatpush1.bf16.msra.mxu0 %v167
    %199 = vmatprep.subr.bf16.mxu0 0
    %200 = vmatpush2.bf16.msra.mxu0 0
    %201 = vmatprep.subr.bf16.mxu0 0
    %202 = vmatpush2.bf16.msra.mxu0 0
    %203 = vmatprep.subr.bf16.mxu0 0
    %204 = vmatpush2.bf16.msra.mxu0 0
    %205 = vmatprep.subr.bf16.mxu0 0
    %206 = vmatpush2.bf16.msra.mxu0 0
    %207 = vmatprep.subr.bf16.mxu0 0
    %208 = vmatpush2.bf16.msra.mxu0 0
    %209 = vmatprep.subr.bf16.mxu0 0
    %210 = vmatpush2.bf16.msra.mxu0 0
    %211 = vmatprep.subr.bf16.mxu0 0
    %212 = vmatpush2.bf16.msra.mxu0 0
    %213 = vmatprep.subr.bf16.mxu0 0
    %214 = vmatpush2.bf16.msra.mxu0 0
    %215 = vmatprep.mubr.bf16.mxu0 0
    %216 = vmatmul.mubr.bf16.gmra.mxu0 %v111
    %v217 = vpop.f32.mrf.mxu0
    %v218 = vadd.f32 %v134, %v217
    %v219 = vpop.f32.mrf.mxu0
    %v220 = vpop.f32.mrf.mxu0
    %v221 = vadd.f32 %v134, %v220
    %v222 = vpop.f32.mrf.mxu0
    %223 = vdwg.mxu0
    %v224 = vmul.f32 %v218, 0.809017
    %v225 = vmul.f32 %v221, 0.809017
    %v226 = vtanh.pop %v224
    %v227 = vtanh.pop %v225
    %v228 = vmul.f32 %v226, 0.809017
    %v229 = vmul.f32 %v227, 0.809017
    %v230 = vadd.f32 %v228, 0.809017
    %v231 = vadd.f32 %v229, 0.809017
    %v232 = vmul.f32 %v218, 0.618034
    %v233 = vmul.f32 %v221, 0.618034
    %v234 = vtanh.pop %v232
    %v235 = vtanh.pop %v233
    %v236 = vmul.f32 %v234, 0.5
    %v237 = vmul.f32 %v235, 0.5
    %v238 = vadd.f32 %v230, %v236
    %v239 = vadd.f32 %v231, %v237
    %v240 = vmul.f32 %v218, 1.1557274
    %v241 = vmul.f32 %v221, 1.1557274
    %v242 = vand.u32 2147483647, %v240
    %vm243 = vcmp.le.f32.partialorder %v242, 0.7853982
    %vm244 = vcmp.lt.s32.totalorder %v240, 0
    %v245 = vand.u32 %v240, 2139095040
    %v246 = vshrl.u32 %v245, 23
    %v247 = vsub.s32 %v246, 127
    %v248 = vand.u32 2147483647, %v240
    %v249 = vand.u32 %v248, 8388607
    %v250 = vor.u32 %v249, 8388608
    %v251 = vsub.s32 0, %v250
    %v252 = vadd.s32 %v247, 1
    %vm253 = vcmp.gt.s32.totalorder %v252, 0
    %v254 = vsel %vm253, %v252, 0
    %v255 = vshrl.u32 %v254, 5
    %v256 = vand.u32 %v254, 31
    %v257 = vsub.s32 32, %v256
    %v258 = vshrl.u32 683565275, %v257
    %v259 = vshll.u32 683565275, %v256
    %v260 = vshrl.u32 2475754826, %v257
    %v261 = vor.u32 %v259, %v260
    %v262 = vshll.u32 2475754826, %v256
    %v263 = vshrl.u32 2131351028, %v257
    %v264 = vor.u32 %v262, %v263
    %v265 = vshll.u32 2131351028, %v256
    %v266 = vshrl.u32 2102212464, %v257
    %v267 = vor.u32 %v265, %v266
    %v268 = vshll.u32 2102212464, %v256
    %v269 = vshrl.u32 920167782, %v257
    %v270 = vor.u32 %v268, %v269
    %v271 = vshll.u32 920167782, %v256
    %v272 = vshrl.u32 1326507024, %v257
    %v273 = vor.u32 %v271, %v272
    %vm274 = vcmp.lt.s32.totalorder %v255, 1
    %vm275 = vcmp.lt.s32.totalorder %v255, 2
    %vm276 = vcmp.lt.s32.totalorder %v255, 3
    %vm277 = vcmp.lt.s32.totalorder %v255, 4
    %v278 = vsel %vm274, %v258, %v261
    %v279 = vsel %vm277, %v267, 2102212464
    %v280 = vsel %vm276, %v264, %v279
    %v281 = vsel %vm275, %v278, %v280
    %v282 = vsel %vm274, %v261, %v264
    %v283 = vsel %vm277, %v270, 920167782
    %v284 = vsel %vm276, %v267, %v283
    %v285 = vsel %vm275, %v282, %v284
    %v286 = vsel %vm274, %v264, %v267
    %v287 = vsel %vm277, %v273, 1326507024
    %v288 = vsel %vm276, %v270, %v287
    %v289 = vsel %vm275, %v286, %v288
    %v290 = vshll.u32 %v250, 8
    %v291 = vmul.u32.u64.compose %v290, %v289
    %v292 = vextract.low.u32 %v291
    %v293 = vextract.high.u32 %v291
    %v294 = vmul.u32.u64.compose %v290, %v285
    %v295 = vextract.low.u32 %v294
    %v296 = vextract.high.u32 %v294
    %v297 = vmul.u32 %v290, %v281
    %v298 = vadd.s32 %v293, %v295
    %vm299 = vc.u32 %v293, %v295
    %v300 = vadd.s32 %v296, 1
    %v301 = vsel %vm299, %v300, %v296
    %v302 = vadd.s32 %v297, %v301
    %v303 = vadd.s32 %v302, 536870912
    %v304 = vshrl.u32 %v303, 30
    %v305 = vshll.u32 %v304, 30
    %v306 = vsub.s32 %v302, %v305
    %vm307 = vcmp.lt.s32.totalorder %v306, 0
    %v308 = vsub.s32 0, %v306
    %v309 = vsel %vm307, %v308, %v306
    %v310 = vclz %v309
    %v311 = vsub.s32 %v310, 2
    %vm312 = vcmp.gt.s32.totalorder 0, %v311
    %v313 = vsel %vm312, 0, %v311
    %v314 = vsub.s32 32, %v313
    %v315 = vshll.u32 %v306, %v313
    %v316 = vshrl.u32 %v298, %v314
    %v317 = vor.u32 %v315, %v316
    %v318 = vsub.s32 4294967266, %v313
    %v319 = vadd.s32 %v318, 127
    %v320 = vshll.u32 %v319, 23
    %v321 = vor.u32 4788187, %v320
    %v322 = vand.u32 2147483647, %v321
    %v324 = vcvt.s32.f32 %v317
    %v325 = vmul.f32 %v324, %v322
    %v326 = vxor.u32 %v325, 2147483648
    %v327 = vsel %vm244, %v326, %v325
    %v328 = vsub.s32 4, %v304
    %v329 = vsel %vm244, %v328, %v304
    %v330 = vsel %vm243, %v240, %v327
    %v331 = vsel %vm243, 0, %v329
    %v332 = vcosq.f32.pop %v330
    %v333 = vsinq.f32.pop %v330
    %vm334 = vweird.f32 %v240
    %v335 = vadd.s32 %v331, 3
    %v336 = vand.u32 %v335, 3
    %vm337 = vcmp.lt.s32.totalorder %v336, 2
    %vm338 = vcmp.eq.s32.totalorder %v336, 0
    %v339 = vxor.u32 %v333, 2147483648
    %v340 = vsel %vm338, %v332, %v339
    %vm341 = vcmp.eq.s32.totalorder %v336, 2
    %v342 = vxor.u32 %v332, 2147483648
    %v343 = vsel %vm341, %v342, %v333
    %v344 = vsel %vm337, %v340, %v343
    %v345 = vsel %vm334, nan, %v344
    %v346 = vand.u32 2147483647, %v241
    %vm347 = vcmp.le.f32.partialorder %v346, 0.7853982
    %vm348 = vcmp.lt.s32.totalorder %v241, 0
    %v349 = vand.u32 %v241, 2139095040
    %v350 = vshrl.u32 %v349, 23
    %v351 = vsub.s32 %v350, 127
    %v352 = vand.u32 2147483647, %v241
    %v353 = vand.u32 %v352, 8388607
    %v354 = vor.u32 %v353, 8388608
    %v355 = vsub.s32 0, %v354
    %v356 = vadd.s32 %v351, 1
    %vm357 = vcmp.gt.s32.totalorder %v356, 0
    %v358 = vsel %vm357, %v356, 0
    %v359 = vshrl.u32 %v358, 5
    %v360 = vand.u32 %v358, 31
    %v361 = vsub.s32 32, %v360
    %v362 = vshrl.u32 683565275, %v361
    %v363 = vshll.u32 683565275, %v360
    %v364 = vshrl.u32 2475754826, %v361
    %v365 = vor.u32 %v363, %v364
    %v366 = vshll.u32 2475754826, %v360
    %v367 = vshrl.u32 2131351028, %v361
    %v368 = vor.u32 %v366, %v367
    %v369 = vshll.u32 2131351028, %v360
    %v370 = vshrl.u32 2102212464, %v361
    %v371 = vor.u32 %v369, %v370
    %v372 = vshll.u32 2102212464, %v360
    %v373 = vshrl.u32 920167782, %v361
    %v374 = vor.u32 %v372, %v373
    %v375 = vshll.u32 920167782, %v360
    %v376 = vshrl.u32 1326507024, %v361
    %v377 = vor.u32 %v375, %v376
    %vm378 = vcmp.lt.s32.totalorder %v359, 1
    %vm379 = vcmp.lt.s32.totalorder %v359, 2
    %vm380 = vcmp.lt.s32.totalorder %v359, 3
    %vm381 = vcmp.lt.s32.totalorder %v359, 4
    %v382 = vsel %vm378, %v362, %v365
    %v383 = vsel %vm381, %v371, 2102212464
    %v384 = vsel %vm380, %v368, %v383
    %v385 = vsel %vm379, %v382, %v384
    %v386 = vsel %vm378, %v365, %v368
    %v387 = vsel %vm381, %v374, 920167782
    %v388 = vsel %vm380, %v371, %v387
    %v389 = vsel %vm379, %v386, %v388
    %v390 = vsel %vm378, %v368, %v371
    %v391 = vsel %vm381, %v377, 1326507024
    %v392 = vsel %vm380, %v374, %v391
    %v393 = vsel %vm379, %v390, %v392
    %v394 = vshll.u32 %v354, 8
    %v395 = vmul.u32.u64.compose %v394, %v393
    %v396 = vextract.low.u32 %v395
    %v397 = vextract.high.u32 %v395
    %v398 = vmul.u32.u64.compose %v394, %v389
    %v399 = vextract.low.u32 %v398
    %v400 = vextract.high.u32 %v398
    %v401 = vmul.u32 %v394, %v385
    %v402 = vadd.s32 %v397, %v399
    %vm403 = vc.u32 %v397, %v399
    %v404 = vadd.s32 %v400, 1
    %v405 = vsel %vm403, %v404, %v400
    %v406 = vadd.s32 %v401, %v405
    %v407 = vadd.s32 %v406, 536870912
    %v408 = vshrl.u32 %v407, 30
    %v409 = vshll.u32 %v408, 30
    %v410 = vsub.s32 %v406, %v409
    %vm411 = vcmp.lt.s32.totalorder %v410, 0
    %v412 = vsub.s32 0, %v410
    %v413 = vsel %vm411, %v412, %v410
    %v414 = vclz %v413
    %v415 = vsub.s32 %v414, 2
    %vm416 = vcmp.gt.s32.totalorder 0, %v415
    %v417 = vsel %vm416, 0, %v415
    %v418 = vsub.s32 32, %v417
    %v419 = vshll.u32 %v410, %v417
    %v420 = vshrl.u32 %v402, %v418
    %v421 = vor.u32 %v419, %v420
    %v422 = vsub.s32 4294967266, %v417
    %v423 = vadd.s32 %v422, 127
    %v424 = vshll.u32 %v423, 23
    %v425 = vor.u32 4788187, %v424
    %v426 = vand.u32 2147483647, %v425
    %v428 = vcvt.s32.f32 %v421
    %v429 = vmul.f32 %v428, %v426
    %v430 = vxor.u32 %v429, 2147483648
    %v431 = vsel %vm348, %v430, %v429
    %v432 = vsub.s32 4, %v408
    %v433 = vsel %vm348, %v432, %v408
    %v434 = vsel %vm347, %v241, %v431
    %v435 = vsel %vm347, 0, %v433
    %v436 = vcosq.f32.pop %v434
    %v437 = vsinq.f32.pop %v434
    %vm438 = vweird.f32 %v241
    %v439 = vadd.s32 %v435, 3
    %v440 = vand.u32 %v439, 3
    %vm441 = vcmp.lt.s32.totalorder %v440, 2
    %vm442 = vcmp.eq.s32.totalorder %v440, 0
    %v443 = vxor.u32 %v437, 2147483648
    %v444 = vsel %vm442, %v436, %v443
    %vm445 = vcmp.eq.s32.totalorder %v440, 2
    %v446 = vxor.u32 %v436, 2147483648
    %v447 = vsel %vm445, %v446, %v437
    %v448 = vsel %vm441, %v444, %v447
    %v449 = vsel %vm438, nan, %v448
    %v450 = vmul.f32 %v345, 0.5
    %v451 = vmul.f32 %v449, 0.5
    %v452 = vadd.f32 %v238, %v450
    %v453 = vadd.f32 %v239, %v451
    %v454 = vmul.f32 %v452, 0.38196602
    %v455 = vmul.f32 %v453, 0.38196602
    %456 = vadd.xlane.f32.xlu0 %v454
    %v457 = vpop.xlane.xlu0 %456
    %458 = vadd.xlane.f32.xlu0 %v455
    %v459 = vpop.xlane.xlu0 %458
    %v460 = vsub.f32 %v457, 23.79431
    %v461 = vsub.f32 %v459, 23.79431
    %v462 = vmul.f32 %v460, 0.019607844
    %v463 = vmul.f32 %v461, 0.019607844
    %v464 = vsub.f32 %v454, %v462
    %v465 = vsub.f32 %v455, %v463
    %v466 = vsub.f32 0.309017, %v462
    %v467 = vsub.f32 0.309017, %v463
    %v468 = vmul.f32 %v464, %v464
    %v469 = vmul.f32 %v465, %v465
    %470 = vadd.xlane.f32.xlu0 %v468
    %v471 = vpop.xlane.xlu0 %470
    %472 = vadd.xlane.f32.xlu0 %v469
    %v473 = vpop.xlane.xlu0 %472
    %v474 = vmul.f32 %v466, 77.0
    %v475 = vmul.f32 %v467, 77.0
    %v476 = vmul.f32 %v474, %v466
    %v477 = vmul.f32 %v475, %v467
    %v478 = vsub.f32 %v471, %v476
    %v479 = vsub.f32 %v473, %v477
    %v480 = vmul.f32 %v478, 0.019607844
    %v481 = vmul.f32 %v479, 0.019607844
    %v482 = vadd.f32 %v480, 1e-05
    %v483 = vadd.f32 %v481, 1e-05
    %v484 = vrsqrt.pop %v482
    %v485 = vrsqrt.pop %v483
    %v486 = vmul.f32 %v464, %v484
    %v487 = vmul.f32 %v465, %v485
    %v488 = vlaneseq
    %v489 = vshrl.u32 %v488, 7
    %v490 = vsub.s32 0, %v489
    %v491 = vrot.slane %v113, %v490
    %v492 = vmul.f32 %v486, %v491
    %v493 = vmul.f32 %v487, %v491
    %v494 = vlaneseq
    %v495 = vshrl.u32 %v494, 7
    %v496 = vsub.s32 0, %v495
    %v497 = vrot.slane %v114, %v496
    %v498 = vadd.f32 %v492, %v497
    %v499 = vadd.f32 %v493, %v497
    %v500 = vpack.c.bf16 %v499, %v498
    %v501 = vld [vmem:[%s5] sm:$0x1]
    %v502 = vld [vmem:[%s5 + $0x1] sm:$0x1]
    %v503 = vld [vmem:[%s5 + $0x2] sm:$0x1]
    %v504 = vld [vmem:[#allocation8] sm:$0xf]
    %v505 = vld [vmem:[#allocation8 + $0x4] sm:$0xf]
    %v506 = vld [vmem:[#allocation8 + $0x8] sm:$0xf]
    %v507 = vld [vmem:[#allocation8 + $0xc] sm:$0xf]
    %v508 = vld [vmem:[#allocation8 + $0x10] sm:$0xf]
    %v509 = vld [vmem:[#allocation8 + $0x14] sm:$0xf]
    %v510 = vld [vmem:[#allocation8 + $0x18] sm:$0xf]
    %v511 = vld [vmem:[#allocation8 + $0x1c] sm:$0xf]
    %v512 = vld [vmem:[#allocation8 + $0x20] sm:$0xf]
    %v513 = vld [vmem:[#allocation8 + $0x24] sm:$0xf]
    %v514 = vld [vmem:[#allocation8 + $0x28] sm:$0xf]
    %v515 = vld [vmem:[#allocation8 + $0x2c] sm:$0xf]
    %v516 = vld [vmem:[#allocation8 + $0x30] sm:$0xf]
    %v517 = vld [vmem:[#allocation8 + $0x34] sm:$0xf]
    %v518 = vld [vmem:[#allocation8 + $0x38] sm:$0xf]
    %v519 = vld [vmem:[#allocation8 + $0x3c] sm:$0xf]
    %v520 = vlaneseq
    %v521 = vshrl.u32 %v520, 7
    %v522 = vsub.s32 0, %v521
    %v523 = vrot.slane %v501, %v522
    %v540 = vunpack.c.l.b16 %v504
    %v541 = vunpack.c.l.b16 %v505
    %v542 = vunpack.c.l.b16 %v506
    %v543 = vunpack.c.l.b16 %v507
    %v544 = vunpack.c.l.b16 %v508
    %v545 = vunpack.c.l.b16 %v509
    %v546 = vunpack.c.l.b16 %v510
    %v547 = vunpack.c.l.b16 %v511
    %v548 = vunpack.c.l.b16 %v512
    %v549 = vunpack.c.l.b16 %v513
    %v550 = vunpack.c.l.b16 %v514
    %v551 = vunpack.c.l.b16 %v515
    %v552 = vunpack.c.l.b16 %v516
    %v553 = vunpack.c.l.b16 %v517
    %v554 = vunpack.c.l.b16 %v518
    %v555 = vunpack.c.l.b16 %v519
    %v556 = vpack.c.b16 %v541, %v540
    %v557 = vpack.c.b16 %v543, %v542
    %v558 = vpack.c.b16 %v545, %v544
    %v559 = vpack.c.b16 %v547, %v546
    %v560 = vpack.c.b16 %v549, %v548
    %v561 = vpack.c.b16 %v551, %v550
    %v562 = vpack.c.b16 %v553, %v552
    %v563 = vpack.c.b16 %v555, %v554
    %572 = vmatprep.subr.bf16.mxu0 0
    %573 = vmatpush1.bf16.msra.mxu0 %v563
    %574 = vmatprep.subr.bf16.mxu0 0
    %575 = vmatpush1.bf16.msra.mxu0 %v562
    %576 = vmatprep.subr.bf16.mxu0 0
    %577 = vmatpush1.bf16.msra.mxu0 %v561
    %578 = vmatprep.subr.bf16.mxu0 0
    %579 = vmatpush1.bf16.msra.mxu0 %v560
    %580 = vmatprep.subr.bf16.mxu0 0
    %581 = vmatpush1.bf16.msra.mxu0 %v559
    %582 = vmatprep.subr.bf16.mxu0 0
    %583 = vmatpush1.bf16.msra.mxu0 %v558
    %584 = vmatprep.subr.bf16.mxu0 0
    %585 = vmatpush1.bf16.msra.mxu0 %v557
    %586 = vmatprep.subr.bf16.mxu0 0
    %587 = vmatpush1.bf16.msra.mxu0 %v556
    %588 = vmatprep.subr.bf16.mxu0 0
    %589 = vmatpush2.bf16.msra.mxu0 0
    %590 = vmatprep.subr.bf16.mxu0 0
    %591 = vmatpush2.bf16.msra.mxu0 0
    %592 = vmatprep.subr.bf16.mxu0 0
    %593 = vmatpush2.bf16.msra.mxu0 0
    %594 = vmatprep.subr.bf16.mxu0 0
    %595 = vmatpush2.bf16.msra.mxu0 0
    %596 = vmatprep.subr.bf16.mxu0 0
    %597 = vmatpush2.bf16.msra.mxu0 0
    %598 = vmatprep.subr.bf16.mxu0 0
    %599 = vmatpush2.bf16.msra.mxu0 0
    %600 = vmatprep.subr.bf16.mxu0 0
    %601 = vmatpush2.bf16.msra.mxu0 0
    %602 = vmatprep.subr.bf16.mxu0 0
    %603 = vmatpush2.bf16.msra.mxu0 0
    %604 = vmatprep.mubr.bf16.mxu0 0
    %605 = vmatmul.mubr.bf16.gmra.mxu0 %v500
    %v606 = vpop.f32.mrf.mxu0
    %v607 = vadd.f32 %v523, %v606
    %v608 = vpop.f32.mrf.mxu0
    %v609 = vpop.f32.mrf.mxu0
    %v610 = vadd.f32 %v523, %v609
    %v611 = vpop.f32.mrf.mxu0
    %612 = vdwg.mxu0
    %v613 = vmul.f32 %v607, 0.809017
    %v614 = vmul.f32 %v610, 0.809017
    %v615 = vtanh.pop %v613
    %v616 = vtanh.pop %v614
    %v617 = vmul.f32 %v615, 0.809017
    %v618 = vmul.f32 %v616, 0.809017
    %v619 = vadd.f32 %v617, 0.809017
    %v620 = vadd.f32 %v618, 0.809017
    %v621 = vmul.f32 %v607, 0.618034
    %v622 = vmul.f32 %v610, 0.618034
    %v623 = vtanh.pop %v621
    %v624 = vtanh.pop %v622
    %v625 = vmul.f32 %v623, 0.5
    %v626 = vmul.f32 %v624, 0.5
    %v627 = vadd.f32 %v619, %v625
    %v628 = vadd.f32 %v620, %v626
    %v629 = vmul.f32 %v607, 1.1557274
    %v630 = vmul.f32 %v610, 1.1557274
    %v631 = vand.u32 2147483647, %v629
    %vm632 = vcmp.le.f32.partialorder %v631, 0.7853982
    %vm633 = vcmp.lt.s32.totalorder %v629, 0
    %v634 = vand.u32 %v629, 2139095040
    %v635 = vshrl.u32 %v634, 23
    %v636 = vsub.s32 %v635, 127
    %v637 = vand.u32 2147483647, %v629
    %v638 = vand.u32 %v637, 8388607
    %v639 = vor.u32 %v638, 8388608
    %v640 = vsub.s32 0, %v639
    %v641 = vadd.s32 %v636, 1
    %vm642 = vcmp.gt.s32.totalorder %v641, 0
    %v643 = vsel %vm642, %v641, 0
    %v644 = vshrl.u32 %v643, 5
    %v645 = vand.u32 %v643, 31
    %v646 = vsub.s32 32, %v645
    %v647 = vshrl.u32 683565275, %v646
    %v648 = vshll.u32 683565275, %v645
    %v649 = vshrl.u32 2475754826, %v646
    %v650 = vor.u32 %v648, %v649
    %v651 = vshll.u32 2475754826, %v645
    %v652 = vshrl.u32 2131351028, %v646
    %v653 = vor.u32 %v651, %v652
    %v654 = vshll.u32 2131351028, %v645
    %v655 = vshrl.u32 2102212464, %v646
    %v656 = vor.u32 %v654, %v655
    %v657 = vshll.u32 2102212464, %v645
    %v658 = vshrl.u32 920167782, %v646
    %v659 = vor.u32 %v657, %v658
    %v660 = vshll.u32 920167782, %v645
    %v661 = vshrl.u32 1326507024, %v646
    %v662 = vor.u32 %v660, %v661
    %vm663 = vcmp.lt.s32.totalorder %v644, 1
    %vm664 = vcmp.lt.s32.totalorder %v644, 2
    %vm665 = vcmp.lt.s32.totalorder %v644, 3
    %vm666 = vcmp.lt.s32.totalorder %v644, 4
    %v667 = vsel %vm663, %v647, %v650
    %v668 = vsel %vm666, %v656, 2102212464
    %v669 = vsel %vm665, %v653, %v668
    %v670 = vsel %vm664, %v667, %v669
    %v671 = vsel %vm663, %v650, %v653
    %v672 = vsel %vm666, %v659, 920167782
    %v673 = vsel %vm665, %v656, %v672
    %v674 = vsel %vm664, %v671, %v673
    %v675 = vsel %vm663, %v653, %v656
    %v676 = vsel %vm666, %v662, 1326507024
    %v677 = vsel %vm665, %v659, %v676
    %v678 = vsel %vm664, %v675, %v677
    %v679 = vshll.u32 %v639, 8
    %v680 = vmul.u32.u64.compose %v679, %v678
    %v681 = vextract.low.u32 %v680
    %v682 = vextract.high.u32 %v680
    %v683 = vmul.u32.u64.compose %v679, %v674
    %v684 = vextract.low.u32 %v683
    %v685 = vextract.high.u32 %v683
    %v686 = vmul.u32 %v679, %v670
    %v687 = vadd.s32 %v682, %v684
    %vm688 = vc.u32 %v682, %v684
    %v689 = vadd.s32 %v685, 1
    %v690 = vsel %vm688, %v689, %v685
    %v691 = vadd.s32 %v686, %v690
    %v692 = vadd.s32 %v691, 536870912
    %v693 = vshrl.u32 %v692, 30
    %v694 = vshll.u32 %v693, 30
    %v695 = vsub.s32 %v691, %v694
    %vm696 = vcmp.lt.s32.totalorder %v695, 0
    %v697 = vsub.s32 0, %v695
    %v698 = vsel %vm696, %v697, %v695
    %v699 = vclz %v698
    %v700 = vsub.s32 %v699, 2
    %vm701 = vcmp.gt.s32.totalorder 0, %v700
    %v702 = vsel %vm701, 0, %v700
    %v703 = vsub.s32 32, %v702
    %v704 = vshll.u32 %v695, %v702
    %v705 = vshrl.u32 %v687, %v703
    %v706 = vor.u32 %v704, %v705
    %v707 = vsub.s32 4294967266, %v702
    %v708 = vadd.s32 %v707, 127
    %v709 = vshll.u32 %v708, 23
    %v710 = vor.u32 4788187, %v709
    %v711 = vand.u32 2147483647, %v710
    %v713 = vcvt.s32.f32 %v706
    %v714 = vmul.f32 %v713, %v711
    %v715 = vxor.u32 %v714, 2147483648
    %v716 = vsel %vm633, %v715, %v714
    %v717 = vsub.s32 4, %v693
    %v718 = vsel %vm633, %v717, %v693
    %v719 = vsel %vm632, %v629, %v716
    %v720 = vsel %vm632, 0, %v718
    %v721 = vcosq.f32.pop %v719
    %v722 = vsinq.f32.pop %v719
    %vm723 = vweird.f32 %v629
    %v724 = vadd.s32 %v720, 3
    %v725 = vand.u32 %v724, 3
    %vm726 = vcmp.lt.s32.totalorder %v725, 2
    %vm727 = vcmp.eq.s32.totalorder %v725, 0
    %v728 = vxor.u32 %v722, 2147483648
    %v729 = vsel %vm727, %v721, %v728
    %vm730 = vcmp.eq.s32.totalorder %v725, 2
    %v731 = vxor.u32 %v721, 2147483648
    %v732 = vsel %vm730, %v731, %v722
    %v733 = vsel %vm726, %v729, %v732
    %v734 = vsel %vm723, nan, %v733
    %v735 = vand.u32 2147483647, %v630
    %vm736 = vcmp.le.f32.partialorder %v735, 0.7853982
    %vm737 = vcmp.lt.s32.totalorder %v630, 0
    %v738 = vand.u32 %v630, 2139095040
    %v739 = vshrl.u32 %v738, 23
    %v740 = vsub.s32 %v739, 127
    %v741 = vand.u32 2147483647, %v630
    %v742 = vand.u32 %v741, 8388607
    %v743 = vor.u32 %v742, 8388608
    %v744 = vsub.s32 0, %v743
    %v745 = vadd.s32 %v740, 1
    %vm746 = vcmp.gt.s32.totalorder %v745, 0
    %v747 = vsel %vm746, %v745, 0
    %v748 = vshrl.u32 %v747, 5
    %v749 = vand.u32 %v747, 31
    %v750 = vsub.s32 32, %v749
    %v751 = vshrl.u32 683565275, %v750
    %v752 = vshll.u32 683565275, %v749
    %v753 = vshrl.u32 2475754826, %v750
    %v754 = vor.u32 %v752, %v753
    %v755 = vshll.u32 2475754826, %v749
    %v756 = vshrl.u32 2131351028, %v750
    %v757 = vor.u32 %v755, %v756
    %v758 = vshll.u32 2131351028, %v749
    %v759 = vshrl.u32 2102212464, %v750
    %v760 = vor.u32 %v758, %v759
    %v761 = vshll.u32 2102212464, %v749
    %v762 = vshrl.u32 920167782, %v750
    %v763 = vor.u32 %v761, %v762
    %v764 = vshll.u32 920167782, %v749
    %v765 = vshrl.u32 1326507024, %v750
    %v766 = vor.u32 %v764, %v765
    %vm767 = vcmp.lt.s32.totalorder %v748, 1
    %vm768 = vcmp.lt.s32.totalorder %v748, 2
    %vm769 = vcmp.lt.s32.totalorder %v748, 3
    %vm770 = vcmp.lt.s32.totalorder %v748, 4
    %v771 = vsel %vm767, %v751, %v754
    %v772 = vsel %vm770, %v760, 2102212464
    %v773 = vsel %vm769, %v757, %v772
    %v774 = vsel %vm768, %v771, %v773
    %v775 = vsel %vm767, %v754, %v757
    %v776 = vsel %vm770, %v763, 920167782
    %v777 = vsel %vm769, %v760, %v776
    %v778 = vsel %vm768, %v775, %v777
    %v779 = vsel %vm767, %v757, %v760
    %v780 = vsel %vm770, %v766, 1326507024
    %v781 = vsel %vm769, %v763, %v780
    %v782 = vsel %vm768, %v779, %v781
    %v783 = vshll.u32 %v743, 8
    %v784 = vmul.u32.u64.compose %v783, %v782
    %v785 = vextract.low.u32 %v784
    %v786 = vextract.high.u32 %v784
    %v787 = vmul.u32.u64.compose %v783, %v778
    %v788 = vextract.low.u32 %v787
    %v789 = vextract.high.u32 %v787
    %v790 = vmul.u32 %v783, %v774
    %v791 = vadd.s32 %v786, %v788
    %vm792 = vc.u32 %v786, %v788
    %v793 = vadd.s32 %v789, 1
    %v794 = vsel %vm792, %v793, %v789
    %v795 = vadd.s32 %v790, %v794
    %v796 = vadd.s32 %v795, 536870912
    %v797 = vshrl.u32 %v796, 30
    %v798 = vshll.u32 %v797, 30
    %v799 = vsub.s32 %v795, %v798
    %vm800 = vcmp.lt.s32.totalorder %v799, 0
    %v801 = vsub.s32 0, %v799
    %v802 = vsel %vm800, %v801, %v799
    %v803 = vclz %v802
    %v804 = vsub.s32 %v803, 2
    %vm805 = vcmp.gt.s32.totalorder 0, %v804
    %v806 = vsel %vm805, 0, %v804
    %v807 = vsub.s32 32, %v806
    %v808 = vshll.u32 %v799, %v806
    %v809 = vshrl.u32 %v791, %v807
    %v810 = vor.u32 %v808, %v809
    %v811 = vsub.s32 4294967266, %v806
    %v812 = vadd.s32 %v811, 127
    %v813 = vshll.u32 %v812, 23
    %v814 = vor.u32 4788187, %v813
    %v815 = vand.u32 2147483647, %v814
    %v817 = vcvt.s32.f32 %v810
    %v818 = vmul.f32 %v817, %v815
    %v819 = vxor.u32 %v818, 2147483648
    %v820 = vsel %vm737, %v819, %v818
    %v821 = vsub.s32 4, %v797
    %v822 = vsel %vm737, %v821, %v797
    %v823 = vsel %vm736, %v630, %v820
    %v824 = vsel %vm736, 0, %v822
    %v825 = vcosq.f32.pop %v823
    %v826 = vsinq.f32.pop %v823
    %vm827 = vweird.f32 %v630
    %v828 = vadd.s32 %v824, 3
    %v829 = vand.u32 %v828, 3
    %vm830 = vcmp.lt.s32.totalorder %v829, 2
    %vm831 = vcmp.eq.s32.totalorder %v829, 0
    %v832 = vxor.u32 %v826, 2147483648
    %v833 = vsel %vm831, %v825, %v832
    %vm834 = vcmp.eq.s32.totalorder %v829, 2
    %v835 = vxor.u32 %v825, 2147483648
    %v836 = vsel %vm834, %v835, %v826
    %v837 = vsel %vm830, %v833, %v836
    %v838 = vsel %vm827, nan, %v837
    %v839 = vmul.f32 %v734, 0.5
    %v840 = vmul.f32 %v838, 0.5
    %v841 = vadd.f32 %v627, %v839
    %v842 = vadd.f32 %v628, %v840
    %v843 = vmul.f32 %v841, 0.38196602
    %v844 = vmul.f32 %v842, 0.38196602
    %845 = vadd.xlane.f32.xlu0 %v843
    %v846 = vpop.xlane.xlu0 %845
    %847 = vadd.xlane.f32.xlu0 %v844
    %v848 = vpop.xlane.xlu0 %847
    %v849 = vsub.f32 %v846, 33.682854
    %v850 = vsub.f32 %v848, 33.682854
    %v851 = vmul.f32 %v849, 0.05263158
    %v852 = vmul.f32 %v850, 0.05263158
    %v853 = vsub.f32 %v843, %v851
    %v854 = vsub.f32 %v844, %v852
    %v855 = vsub.f32 0.309017, %v851
    %v856 = vsub.f32 0.309017, %v852
    %v857 = vmul.f32 %v853, %v853
    %v858 = vmul.f32 %v854, %v854
    %859 = vadd.xlane.f32.xlu0 %v857
    %v860 = vpop.xlane.xlu0 %859
    %861 = vadd.xlane.f32.xlu0 %v858
    %v862 = vpop.xlane.xlu0 %861
    %v863 = vmul.f32 %v855, 109.0
    %v864 = vmul.f32 %v856, 109.0
    %v865 = vmul.f32 %v863, %v855
    %v866 = vmul.f32 %v864, %v856
    %v867 = vsub.f32 %v860, %v865
    %v868 = vsub.f32 %v862, %v866
    %v869 = vmul.f32 %v867, 0.05263158
    %v870 = vmul.f32 %v868, 0.05263158
    %v871 = vadd.f32 %v869, 1e-05
    %v872 = vadd.f32 %v870, 1e-05
    %v873 = vrsqrt.pop %v871
    %v874 = vrsqrt.pop %v872
    %v875 = vmul.f32 %v853, %v873
    %v876 = vmul.f32 %v854, %v874
    %v877 = vlaneseq
    %v878 = vshrl.u32 %v877, 7
    %v879 = vsub.s32 0, %v878
    %v880 = vrot.slane %v502, %v879
    %v881 = vmul.f32 %v875, %v880
    %v882 = vmul.f32 %v876, %v880
    %v883 = vlaneseq
    %v884 = vshrl.u32 %v883, 7
    %v885 = vsub.s32 0, %v884
    %v886 = vrot.slane %v503, %v885
    %v887 = vadd.f32 %v881, %v886
    %v888 = vadd.f32 %v882, %v886
    %v889 = vpack.c.bf16 %v888, %v887
    %v890 = vld [vmem:[#allocation9] sm:$0xf]
    %v891 = vld [vmem:[#allocation9 + $0x4] sm:$0xf]
    %v892 = vld [vmem:[#allocation9 + $0x8] sm:$0xf]
    %v893 = vld [vmem:[#allocation9 + $0xc] sm:$0xf]
    %v894 = vld [vmem:[#allocation9 + $0x10] sm:$0xf]
    %v895 = vld [vmem:[#allocation9 + $0x14] sm:$0xf]
    %v896 = vld [vmem:[#allocation9 + $0x18] sm:$0xf]
    %v897 = vld [vmem:[#allocation9 + $0x1c] sm:$0xf]
    %v898 = vld [vmem:[#allocation9 + $0x20] sm:$0xf]
    %v899 = vld [vmem:[#allocation9 + $0x24] sm:$0xf]
    %v900 = vld [vmem:[#allocation9 + $0x28] sm:$0xf]
    %v901 = vld [vmem:[#allocation9 + $0x2c] sm:$0xf]
    %v902 = vld [vmem:[#allocation9 + $0x30] sm:$0xf]
    %v903 = vld [vmem:[#allocation9 + $0x34] sm:$0xf]
    %v904 = vld [vmem:[#allocation9 + $0x38] sm:$0xf]
    %v905 = vld [vmem:[#allocation9 + $0x3c] sm:$0xf]
    %v906 = vld [vmem:[%s8] sm:$0x1]
    %v907 = vlaneseq
    %v908 = vshrl.u32 %v907, 7
    %v909 = vsub.s32 0, %v908
    %v910 = vrot.slane %v906, %v909
    %v927 = vunpack.c.l.b16 %v890
    %v928 = vunpack.c.l.b16 %v891
    %v929 = vunpack.c.l.b16 %v892
    %v930 = vunpack.c.l.b16 %v893
    %v931 = vunpack.c.l.b16 %v894
    %v932 = vunpack.c.l.b16 %v895
    %v933 = vunpack.c.l.b16 %v896
    %v934 = vunpack.c.l.b16 %v897
    %v935 = vunpack.c.l.b16 %v898
    %v936 = vunpack.c.l.b16 %v899
    %v937 = vunpack.c.l.b16 %v900
    %v938 = vunpack.c.l.b16 %v901
    %v939 = vunpack.c.l.b16 %v902
    %v940 = vunpack.c.l.b16 %v903
    %v941 = vunpack.c.l.b16 %v904
    %v942 = vunpack.c.l.b16 %v905
    %v943 = vpack.c.b16 %v928, %v927
    %v944 = vpack.c.b16 %v930, %v929
    %v945 = vpack.c.b16 %v932, %v931
    %v946 = vpack.c.b16 %v934, %v933
    %v947 = vpack.c.b16 %v936, %v935
    %v948 = vpack.c.b16 %v938, %v937
    %v949 = vpack.c.b16 %v940, %v939
    %v950 = vpack.c.b16 %v942, %v941
    %959 = vmatprep.subr.bf16.mxu0 0
    %960 = vmatpush1.bf16.msra.mxu0 %v950
    %961 = vmatprep.subr.bf16.mxu0 0
    %962 = vmatpush1.bf16.msra.mxu0 %v949
    %963 = vmatprep.subr.bf16.mxu0 0
    %964 = vmatpush1.bf16.msra.mxu0 %v948
    %965 = vmatprep.subr.bf16.mxu0 0
    %966 = vmatpush1.bf16.msra.mxu0 %v947
    %967 = vmatprep.subr.bf16.mxu0 0
    %968 = vmatpush1.bf16.msra.mxu0 %v946
    %969 = vmatprep.subr.bf16.mxu0 0
    %970 = vmatpush1.bf16.msra.mxu0 %v945
    %971 = vmatprep.subr.bf16.mxu0 0
    %972 = vmatpush1.bf16.msra.mxu0 %v944
    %973 = vmatprep.subr.bf16.mxu0 0
    %974 = vmatpush1.bf16.msra.mxu0 %v943
    %975 = vmatprep.subr.bf16.mxu0 0
    %976 = vmatpush2.bf16.msra.mxu0 0
    %977 = vmatprep.subr.bf16.mxu0 0
    %978 = vmatpush2.bf16.msra.mxu0 0
    %979 = vmatprep.subr.bf16.mxu0 0
    %980 = vmatpush2.bf16.msra.mxu0 0
    %981 = vmatprep.subr.bf16.mxu0 0
    %982 = vmatpush2.bf16.msra.mxu0 0
    %983 = vmatprep.subr.bf16.mxu0 0
    %984 = vmatpush2.bf16.msra.mxu0 0
    %985 = vmatprep.subr.bf16.mxu0 0
    %986 = vmatpush2.bf16.msra.mxu0 0
    %987 = vmatprep.subr.bf16.mxu0 0
    %988 = vmatpush2.bf16.msra.mxu0 0
    %989 = vmatprep.subr.bf16.mxu0 0
    %990 = vmatpush2.bf16.msra.mxu0 0
    %991 = vmatprep.mubr.bf16.mxu0 0
    %992 = vmatmul.mubr.bf16.gmra.mxu0 %v889
    %v993 = vpop.f32.mrf.mxu0
    %v994 = vadd.f32 %v910, %v993
    %v995 = vpop.f32.mrf.mxu0
    %v996 = vpop.f32.mrf.mxu0
    %v997 = vadd.f32 %v910, %v996
    %v998 = vpop.f32.mrf.mxu0
    %999 = vdwg.mxu0
    %v1000 = vpack.c.bf16 %v997, %v994
    %v1001 = vld [vmem:[#allocation11] sm:$0xf]
    %v1002 = vld [vmem:[#allocation11 + $0x4] sm:$0xf]
    %v1003 = vld [vmem:[#allocation11 + $0x8] sm:$0xf]
    %v1004 = vld [vmem:[#allocation11 + $0xc] sm:$0xf]
    %v1005 = vld [vmem:[#allocation11 + $0x10] sm:$0xf]
    %v1006 = vld [vmem:[#allocation11 + $0x14] sm:$0xf]
    %v1007 = vld [vmem:[#allocation11 + $0x18] sm:$0xf]
    %v1008 = vld [vmem:[#allocation11 + $0x1c] sm:$0xf]
    %v1009 = vld [vmem:[#allocation11 + $0x20] sm:$0xf]
    %v1010 = vld [vmem:[#allocation11 + $0x24] sm:$0xf]
    %v1011 = vld [vmem:[#allocation11 + $0x28] sm:$0xf]
    %v1012 = vld [vmem:[#allocation11 + $0x2c] sm:$0xf]
    %v1013 = vld [vmem:[#allocation11 + $0x30] sm:$0xf]
    %v1014 = vld [vmem:[#allocation11 + $0x34] sm:$0xf]
    %v1015 = vld [vmem:[#allocation11 + $0x38] sm:$0xf]
    %v1016 = vld [vmem:[#allocation11 + $0x3c] sm:$0xf]
    %v1017 = vld [vmem:[%s8 + $0x1] sm:$0x1]
    %v1018 = vlaneseq
    %v1019 = vshrl.u32 %v1018, 7
    %v1020 = vsub.s32 0, %v1019
    %v1021 = vrot.slane %v1017, %v1020
    %v1038 = vunpack.c.l.b16 %v1001
    %v1039 = vunpack.c.l.b16 %v1002
    %v1040 = vunpack.c.l.b16 %v1003
    %v1041 = vunpack.c.l.b16 %v1004
    %v1042 = vunpack.c.l.b16 %v1005
    %v1043 = vunpack.c.l.b16 %v1006
    %v1044 = vunpack.c.l.b16 %v1007
    %v1045 = vunpack.c.l.b16 %v1008
    %v1046 = vunpack.c.l.b16 %v1009
    %v1047 = vunpack.c.l.b16 %v1010
    %v1048 = vunpack.c.l.b16 %v1011
    %v1049 = vunpack.c.l.b16 %v1012
    %v1050 = vunpack.c.l.b16 %v1013
    %v1051 = vunpack.c.l.b16 %v1014
    %v1052 = vunpack.c.l.b16 %v1015
    %v1053 = vunpack.c.l.b16 %v1016
    %v1054 = vpack.c.b16 %v1039, %v1038
    %v1055 = vpack.c.b16 %v1041, %v1040
    %v1056 = vpack.c.b16 %v1043, %v1042
    %v1057 = vpack.c.b16 %v1045, %v1044
    %v1058 = vpack.c.b16 %v1047, %v1046
    %v1059 = vpack.c.b16 %v1049, %v1048
    %v1060 = vpack.c.b16 %v1051, %v1050
    %v1061 = vpack.c.b16 %v1053, %v1052
    %1070 = vmatprep.subr.bf16.mxu0 0
    %1071 = vmatpush1.bf16.msra.mxu0 %v1061
    %1072 = vmatprep.subr.bf16.mxu0 0
    %1073 = vmatpush1.bf16.msra.mxu0 %v1060
    %1074 = vmatprep.subr.bf16.mxu0 0
    %1075 = vmatpush1.bf16.msra.mxu0 %v1059
    %1076 = vmatprep.subr.bf16.mxu0 0
    %1077 = vmatpush1.bf16.msra.mxu0 %v1058
    %1078 = vmatprep.subr.bf16.mxu0 0
    %1079 = vmatpush1.bf16.msra.mxu0 %v1057
    %1080 = vmatprep.subr.bf16.mxu0 0
    %1081 = vmatpush1.bf16.msra.mxu0 %v1056
    %1082 = vmatprep.subr.bf16.mxu0 0
    %1083 = vmatpush1.bf16.msra.mxu0 %v1055
    %1084 = vmatprep.subr.bf16.mxu0 0
    %1085 = vmatpush1.bf16.msra.mxu0 %v1054
    %1086 = vmatprep.subr.bf16.mxu0 0
    %1087 = vmatpush2.bf16.msra.mxu0 0
    %1088 = vmatprep.subr.bf16.mxu0 0
    %1089 = vmatpush2.bf16.msra.mxu0 0
    %1090 = vmatprep.subr.bf16.mxu0 0
    %1091 = vmatpush2.bf16.msra.mxu0 0
    %1092 = vmatprep.subr.bf16.mxu0 0
    %1093 = vmatpush2.bf16.msra.mxu0 0
    %1094 = vmatprep.subr.bf16.mxu0 0
    %1095 = vmatpush2.bf16.msra.mxu0 0
    %1096 = vmatprep.subr.bf16.mxu0 0
    %1097 = vmatpush2.bf16.msra.mxu0 0
    %1098 = vmatprep.subr.bf16.mxu0 0
    %1099 = vmatpush2.bf16.msra.mxu0 0
    %1100 = vmatprep.subr.bf16.mxu0 0
    %1101 = vmatpush2.bf16.msra.mxu0 0
    %1102 = vmatprep.mubr.bf16.mxu0 0
    %1103 = vmatmul.mubr.bf16.gmra.mxu0 %v1000
    %v1104 = vpop.f32.mrf.mxu0
    %v1105 = vadd.f32 %v1021, %v1104
    %v1106 = vpop.f32.mrf.mxu0
    %v1107 = vpop.f32.mrf.mxu0
    %v1108 = vadd.f32 %v1021, %v1107
    %v1109 = vpop.f32.mrf.mxu0
    %1110 = vdwg.mxu0
    %1111 = vst [vmem:[#allocation12] sm:$0xff] %v1105
    %1112 = vst [vmem:[#allocation12 + $0x8] sm:$0xff] %v1108
    // Predicated region
    $region58: #{tpu_custom_call.1} parent=1 // pred_check
      _
    $region59: #{tpu_custom_call.1} parent=1 // pred_check_branch
      %1114 = sbr.rel (0) target = $region61
    $region60: #{tpu_custom_call.1} parent=1 // pred_region
      %s1116 = ssub.s32 256, 256
      %1117 = vsyncadd [#allocation5], %s1116
      %s1118 = sshll.u32 [#allocation12], 4
      %s1119 = int_to_ptr.vmem [resolvable:$true] %s1118
      %1124 = dma.vmem_to_hbm [thread:$0]  %s1119, 256, %s9, [#allocation5], 128, 128, 8
    $region61: #{tpu_custom_call.1} parent=1 // pred_fallthru
      _
    // Predicated region
    $region62: #{tpu_custom_call.1} parent=1 // pred_check
      _
    $region63: #{tpu_custom_call.1} parent=1 // pred_check_branch
      %1126 = sbr.rel (0) target = $region65
    $region64: #{tpu_custom_call.1} parent=1 // pred_region
      %1127 = dma.done [#allocation5], 256
    $region65: #{tpu_custom_call.1} parent=1 // pred_fallthru
      _
    %1128 = vsyncpa [#allocation4], 1
    %1129 = vsyncpa [#allocation7], 1
    %1130 = vsyncpa [#allocation10], 1
    %1131 = vsyncpa [#allocation5], 1

</llo_original>
